<compile_context>
chip_gen: v7x
topology: tpu7x:2x2x1
jax: 0.10.0
libtpu: 0.0.40
codegen_flags: <defaults>
</compile_context>

<pallas_src>
import jax
import jax.numpy as jnp
from jax import lax
from jax.experimental import pallas as pl
from jax.experimental.pallas import tpu as pltpu


# --------------------------- VMEM budgeting helpers ------------------------ #
def _vmem_capacity_bytes():
    try:
        info = pltpu.get_tpu_info()
        return int(getattr(info, "vmem_capacity_bytes", 64 * 1024 * 1024))
    except Exception:  # conservative fallback (v7x per-TC VMEM)
        return 64 * 1024 * 1024


def _pick_qkv_tiles(n_rows, h_in, n_cols, itemsize, budget_bytes):
    """VMEM-aware (tm, tn) for the QKV projection.

    Accounts for default double-buffering of every block (x2) so the chosen
    tiles stay within `budget_bytes` even without single-buffered weights.
    Tiles are multiples of (8, 128) or the full dim, so stores stay unmasked.
    """
    # Column tile: lane-dense multiple of 128 dividing 3H, capped so the
    # (double-buffered) resident weight block uses at most half the budget.
    tn = n_cols
    if n_cols % 128 == 0:
        tn = 128
        for cand in (2048, 1024, 768, 512, 384, 256, 128):
            if cand <= n_cols and n_cols % cand == 0 and \
                    2 * h_in * cand * itemsize <= budget_bytes // 2:
                tn = cand
                break
    w_bytes = 2 * (h_in * tn + tn) * itemsize
    # Row tile: largest multiple of 8 dividing N whose x/out blocks still fit.
    tm = n_rows  # full-dim block is always legal; only hit for tiny/odd N
    for cand in (1024, 512, 256, 128, 64, 32, 16, 8):
        if cand <= n_rows and n_rows % cand == 0 and \
                w_bytes + 2 * cand * (h_in + tn) * itemsize <= budget_bytes:
            tm = cand
            break
    return tm, tn


# ----------------------- Kernel 1: fused QKV projection -------------------- #
def _qkv_proj_kernel(x_ref, w_ref, b_ref, qkv_ref):
    # One fused MXU matmul per (row-tile, col-tile): (tm, H) @ (H, tn) + bias.
    # Output is a single lane-dense slab (no narrow masked stores).
    qkv_ref[...] = (
        jnp.dot(x_ref[...], w_ref[...], preferred_element_type=jnp.float32)
        + b_ref[...]
    ).astype(qkv_ref.dtype)


# ------------- Kernel 2: fused multi-head attention + out-proj ------------- #
def _attn_out_kernel(q_ref, k_ref, v_ref, wo_ref, bo_ref, o_ref, ctx_ref):
    # q/k/v refs: (1, num_heads, S, dh) -- all heads of one batch element.
    # ctx_ref: (S, H) f32 VMEM scratch slab.  Head h of torch's
    # transpose(1,2).contiguous().view(B,-1,H) tensor occupies columns
    # [h*dh, (h+1)*dh), so writing ctx_h into that column slice and doing one
    # deep (S,H)@(H,H) matmul reproduces the reference output projection with
    # full MXU contraction depth (no per-head shallow matmuls, no vreg-carried
    # accumulator).
    num_heads = q_ref.shape[1]
    dh = q_ref.shape[3]

    for h in range(num_heads):          # static unroll; no value carried
        q = q_ref[0, h]                 # (S, dh) -- scale folded into wq/bq
        k = k_ref[0, h]
        v = v_ref[0, h]
        # q @ k.T without materializing a transpose: contract last dims.
        scores = lax.dot_general(q, k, (((1,), (1,)), ((), ())),
                                 preferred_element_type=jnp.float32)  # (S, S)
        m = jnp.max(scores, axis=-1, keepdims=True)
        p = jnp.exp(scores - m)
        l = jnp.sum(p, axis=-1, keepdims=True)
        ctx = jnp.dot(p, v, preferred_element_type=jnp.float32)       # (S, dh)
        # Deferred normalization: one EUP reciprocal instead of (S,S) divides.
        ctx = ctx * pl.reciprocal(l, approx=True)
        ctx_ref[:, h * dh:(h + 1) * dh] = ctx       # static lane-slice store

    o_ref[0] = (
        jnp.dot(ctx_ref[...], wo_ref[...], preferred_element_type=jnp.float32)
        + bo_ref[...]
    ).astype(o_ref.dtype)


# ------------------------- One-time parameter packing ---------------------- #
def prepare_params(params, num_heads):
    """Repack/pre-transpose weights ONCE (cache the result; do not call per step)."""
    H = params["wq"].shape[0]
    assert H % num_heads == 0
    dh = H // num_heads
    scale = 1.0 / float(dh) ** 0.5
    # Fused, pre-transposed QKV weight (H, 3H); softmax scale folded into the
    # q slice (and q bias), so the kernel never multiplies by scale.
    w_qkv = jnp.concatenate(
        [params["wq"] * scale, params["wk"], params["wv"]], axis=0).T
    b_qkv = jnp.concatenate(
        [params["bq"] * scale, params["bk"], params["bv"]]).reshape(1, 3 * H)
    w_o = params["wo"].T                       # (H, H), pre-transposed
    b_o = params["bo"].reshape(1, H)
    return {"w_qkv": w_qkv, "b_qkv": b_qkv, "w_o": w_o, "b_o": b_o}


# ------------------------------- Forward pass ------------------------------ #
def self_attention(x, packed, num_heads, *, qkv_dtype=None):
    """Forward pass of the PyTorch SelfAttention module. x: (B, S, H).

    `packed` comes from prepare_params().  qkv_dtype controls the dtype of the
    HBM q/k/v round-trip between the two kernels (pass jnp.bfloat16 at scale
    to halve that mem-bound traffic; compute stays f32 inside both kernels).
    """
    B, S, H = x.shape
    assert H % num_heads == 0
    dh = H // num_heads
    N = B * S
    qkv_dtype = x.dtype if qkv_dtype is None else qkv_dtype
    itemsize = jnp.dtype(jnp.float32).itemsize

    cap = _vmem_capacity_bytes()
    vmem_limit = min(int(cap * 3 // 4), 96 * 1024 * 1024)
    budget = int(vmem_limit * 0.8)

    x2d = x.reshape(N, H)
    tm, tn = _pick_qkv_tiles(N, H, 3 * H, itemsize, budget)

    # --- Kernel 1: fused QKV projection, (row, col)-tiled, lane-dense out ---
    qkv = pl.pallas_call(
        _qkv_proj_kernel,
        out_shape=jax.ShapeDtypeStruct((N, 3 * H), qkv_dtype),
        grid=(N // tm, (3 * H) // tn),
        in_specs=[
            pl.BlockSpec((tm, H), lambda i, j: (i, 0)),
            pl.BlockSpec((H, tn), lambda i, j: (0, j)),
            pl.BlockSpec((1, tn), lambda i, j: (0, j)),
        ],
        out_specs=pl.BlockSpec((tm, tn), lambda i, j: (i, j)),
        compiler_params=pltpu.CompilerParams(
            dimension_semantics=("parallel", "parallel"),
            vmem_limit_bytes=vmem_limit),
    )(x2d, packed["w_qkv"], packed["b_qkv"])

    # torch's q.view(B, num_heads, -1, dh) is a raw row-major reinterpretation
    # of the contiguous (B, S, H) buffer -> cheap XLA slice + reshape here.
    q4 = qkv[:, :H].reshape(B, num_heads, S, dh)
    k4 = qkv[:, H:2 * H].reshape(B, num_heads, S, dh)
    v4 = qkv[:, 2 * H:].reshape(B, num_heads, S, dh)

    # --- Kernel 2: attention core + single deep output projection per batch --
    out = pl.pallas_call(
        _attn_out_kernel,
        out_shape=jax.ShapeDtypeStruct((B, S, H), x.dtype),
        grid=(B,),
        in_specs=[
            pl.BlockSpec((1, num_heads, S, dh), lambda b: (b, 0, 0, 0)),
            pl.BlockSpec((1, num_heads, S, dh), lambda b: (b, 0, 0, 0)),
            pl.BlockSpec((1, num_heads, S, dh), lambda b: (b, 0, 0, 0)),
            pl.BlockSpec((H, H), lambda b: (0, 0)),     # resident across steps
            pl.BlockSpec((1, H), lambda b: (0, 0)),     # resident across steps
        ],
        out_specs=pl.BlockSpec((1, S, H), lambda b: (b, 0, 0)),
        scratch_shapes=[pltpu.VMEM((S, H), jnp.float32)],   # ctx slab in VMEM
        compiler_params=pltpu.CompilerParams(
            dimension_semantics=("parallel",),
            vmem_limit_bytes=vmem_limit),
    )(q4, k4, v4, packed["w_o"], packed["b_o"])
    return out


# --------------------------- Pure-JAX reference ---------------------------- #
def self_attention_ref(x, params, num_heads):
    B, S, H = x.shape
    dh = H // num_heads

    def lin(t, w, b):
        return t @ w.T + b

    q = lin(x, params["wq"], params["bq"]).reshape(B, num_heads, S, dh)
    k = lin(x, params["wk"], params["bk"]).reshape(B, num_heads, S, dh)
    v = lin(x, params["wv"], params["bv"]).reshape(B, num_heads, S, dh)
    aw = jnp.einsum("bhqd,bhkd->bhqk", q, k) / (dh ** 0.5)
    p = jax.nn.softmax(aw, axis=-1)
    ctx = jnp.einsum("bhqk,bhkd->bhqd", p, v)
    ctx = ctx.transpose(0, 2, 1, 3).reshape(B, S, H)
    return lin(ctx, params["wo"], params["bo"])


# ---------------------------------- Main ----------------------------------- #
def init_params(key, hidden_dim):
    # Deterministic init mimicking torch nn.Linear default U(-1/sqrt(in), 1/sqrt(in)).
    bound = 1.0 / (hidden_dim ** 0.5)
    keys = jax.random.split(key, 8)
    names = ["wq", "bq", "wk", "bk", "wv", "bv", "wo", "bo"]
    shapes = [(hidden_dim, hidden_dim), (hidden_dim,)] * 4
    return {
        n: jax.random.uniform(k, s, jnp.float32, minval=-bound, maxval=bound)
        for n, k, s in zip(names, keys, shapes)
    }


if __name__ == "__main__":
    B, S, H, NUM_HEADS = 2, 8, 32, 4

    key = jax.random.PRNGKey(0)
    kx, kp = jax.random.split(key)
    x = jax.random.normal(kx, (B, S, H), dtype=jnp.float32)
    params = init_params(kp, H)

    # Weight repacking happens ONCE here (not inside the forward call).
    packed = prepare_params(params, NUM_HEADS)

    fwd = jax.jit(self_attention, static_argnums=(2,))
    out = jax.block_until_ready(fwd(x, packed, NUM_HEADS))
    ref = self_attention_ref(x, params, NUM_HEADS)

    assert out.shape == (B, S, H)
    # pl.reciprocal(approx=True) for softmax normalization introduces
    # ~1e-4-level differences vs exact division; 5e-3 leaves comfortable margin.
    err = float(jnp.max(jnp.abs(out - ref)))
    assert err < 5e-3, f"mismatch vs reference: max abs err = {err}"

    print("KERNEL_OK")
</pallas_src>

<mosaic_0001>
module attributes {stable_mosaic.version = 11 : i64} {
  func.func @_qkv_proj_kernel(%arg0: i32, %arg1: i32, %arg2: memref<16x32xf32, #tpu.memory_space<vmem>>, %arg3: memref<32x96xf32, #tpu.memory_space<vmem>>, %arg4: memref<1x96xf32, #tpu.memory_space<vmem>>, %arg5: memref<16x96xf32, #tpu.memory_space<vmem>>) attributes {dimension_semantics = [#tpu.dimension_semantics<parallel>, #tpu.dimension_semantics<parallel>], iteration_bounds = array<i64: 1, 1>, scalar_prefetch = 0 : i64, scratch_operands = 0 : i64, tpu.core_type = #tpu.core_type<tc>, window_params = [{transform_indices = @transform_0, window_bounds = array<i64: 16, 32>}, {transform_indices = @transform_1, window_bounds = array<i64: 32, 96>}, {transform_indices = @transform_2, window_bounds = array<i64: 1, 96>}, {transform_indices = @transform_3, window_bounds = array<i64: 16, 96>}]} {
    %c0 = arith.constant 0 : index
    %c0_0 = arith.constant 0 : index
    %0 = vector.load %arg2[%c0, %c0_0] : memref<16x32xf32, #tpu.memory_space<vmem>>, vector<16x32xf32>
    %c0_1 = arith.constant 0 : index
    %c0_2 = arith.constant 0 : index
    %1 = vector.load %arg3[%c0_1, %c0_2] : memref<32x96xf32, #tpu.memory_space<vmem>>, vector<32x96xf32>
    %cst = arith.constant dense<0.000000e+00> : vector<16x96xf32>
    %2 = tpu.matmul %0, %1, %cst {dimension_numbers = #tpu.dot_dimension_numbers<[1], [0], [0], [1], [0, 0, 1, 1], [], []>} : vector<16x32xf32>, vector<32x96xf32>, vector<16x96xf32> -> vector<16x96xf32>
    %c0_3 = arith.constant 0 : index
    %c0_4 = arith.constant 0 : index
    %3 = vector.load %arg4[%c0_3, %c0_4] : memref<1x96xf32, #tpu.memory_space<vmem>>, vector<1x96xf32>
    %4 = vector.broadcast %3 : vector<1x96xf32> to vector<16x96xf32>
    %5 = arith.addf %2, %4 : vector<16x96xf32>
    %c0_5 = arith.constant 0 : index
    %c0_6 = arith.constant 0 : index
    %6 = vector.load %arg5[%c0_5, %c0_6] : memref<16x96xf32, #tpu.memory_space<vmem>>, vector<16x96xf32>
    tpu.vector_store %arg5[%c0_5, %c0_6], %5 {strides = array<i32>} : memref<16x96xf32, #tpu.memory_space<vmem>>, vector<16x96xf32>,
    return
  }
  func.func @transform_0(%arg0: i32, %arg1: i32) -> (i32, i32) {
    %c0_i32 = arith.constant 0 : i32
    %c0_i32_0 = arith.constant 0 : i32
    return %arg0, %c0_i32 : i32, i32
  }
  func.func @transform_1(%arg0: i32, %arg1: i32) -> (i32, i32) {
    %c0_i32 = arith.constant 0 : i32
    %c0_i32_0 = arith.constant 0 : i32
    return %c0_i32, %arg1 : i32, i32
  }
  func.func @transform_2(%arg0: i32, %arg1: i32) -> (i32, i32) {
    %c0_i32 = arith.constant 0 : i32
    %c0_i32_0 = arith.constant 0 : i32
    return %c0_i32, %arg1 : i32, i32
  }
  func.func @transform_3(%arg0: i32, %arg1: i32) -> (i32, i32) {
    %c0_i32 = arith.constant 0 : i32
    return %arg0, %arg1 : i32, i32
  }
}

module attributes {stable_mosaic.version = 11 : i64} {
  func.func @_attn_out_kernel(%arg0: i32, %arg1: memref<1x4x8x8xf32, #tpu.memory_space<vmem>>, %arg2: memref<1x4x8x8xf32, #tpu.memory_space<vmem>>, %arg3: memref<1x4x8x8xf32, #tpu.memory_space<vmem>>, %arg4: memref<32x32xf32, #tpu.memory_space<vmem>>, %arg5: memref<1x32xf32, #tpu.memory_space<vmem>>, %arg6: memref<1x8x32xf32, #tpu.memory_space<vmem>>, %arg7: memref<8x32xf32, #tpu.memory_space<vmem>>) attributes {dimension_semantics = [#tpu.dimension_semantics<parallel>], iteration_bounds = array<i64: 2>, scalar_prefetch = 0 : i64, scratch_operands = 1 : i64, tpu.core_type = #tpu.core_type<tc>, window_params = [{transform_indices = @transform_0, window_bounds = array<i64: 1, 4, 8, 8>}, {transform_indices = @transform_1, window_bounds = array<i64: 1, 4, 8, 8>}, {transform_indices = @transform_2, window_bounds = array<i64: 1, 4, 8, 8>}, {pipeline_mode = #tpu.pipeline_mode<synchronous>, transform_indices = @transform_3, window_bounds = array<i64: 32, 32>}, {pipeline_mode = #tpu.pipeline_mode<synchronous>, transform_indices = @transform_4, window_bounds = array<i64: 1, 32>}, {transform_indices = @transform_5, window_bounds = array<i64: 1, 8, 32>}]} {
    %c0 = arith.constant 0 : index
    %c0_0 = arith.constant 0 : index
    %c0_1 = arith.constant 0 : index
    %c0_2 = arith.constant 0 : index
    %0 = vector.load %arg1[%c0, %c0_0, %c0_1, %c0_2] : memref<1x4x8x8xf32, #tpu.memory_space<vmem>>, vector<1x1x8x8xf32>
    %1 = vector.shape_cast %0 : vector<1x1x8x8xf32> to vector<8x8xf32>
    %c0_3 = arith.constant 0 : index
    %c0_4 = arith.constant 0 : index
    %c0_5 = arith.constant 0 : index
    %c0_6 = arith.constant 0 : index
    %2 = vector.load %arg2[%c0_3, %c0_4, %c0_5, %c0_6] : memref<1x4x8x8xf32, #tpu.memory_space<vmem>>, vector<1x1x8x8xf32>
    %3 = vector.shape_cast %2 : vector<1x1x8x8xf32> to vector<8x8xf32>
    %c0_7 = arith.constant 0 : index
    %c0_8 = arith.constant 0 : index
    %c0_9 = arith.constant 0 : index
    %c0_10 = arith.constant 0 : index
    %4 = vector.load %arg3[%c0_7, %c0_8, %c0_9, %c0_10] : memref<1x4x8x8xf32, #tpu.memory_space<vmem>>, vector<1x1x8x8xf32>
    %5 = vector.shape_cast %4 : vector<1x1x8x8xf32> to vector<8x8xf32>
    %cst = arith.constant dense<0.000000e+00> : vector<8x8xf32>
    %6 = tpu.matmul %1, %3, %cst {dimension_numbers = #tpu.dot_dimension_numbers<[1], [1], [0], [0], [0, 0, 1, 0], [], []>} : vector<8x8xf32>, vector<8x8xf32>, vector<8x8xf32> -> vector<8x8xf32>
    %cst_11 = arith.constant dense<0xFF800000> : vector<8xf32>
    %7 = vector.multi_reduction <maximumf>, %6, %cst_11 [1] : vector<8x8xf32> to vector<8xf32>
    %8 = vector.shape_cast %7 : vector<8xf32> to vector<8x1xf32>
    %9 = vector.broadcast %8 : vector<8x1xf32> to vector<8x8xf32>
    %10 = arith.subf %6, %9 : vector<8x8xf32>
    %11 = math.exp %10 : vector<8x8xf32>
    %cst_12 = arith.constant dense<0.000000e+00> : vector<8xf32>
    %12 = vector.multi_reduction <add>, %11, %cst_12 [1] : vector<8x8xf32> to vector<8xf32>
    %13 = vector.shape_cast %12 : vector<8xf32> to vector<8x1xf32>
    %cst_13 = arith.constant dense<0.000000e+00> : vector<8x8xf32>
    %14 = tpu.matmul %11, %5, %cst_13 {dimension_numbers = #tpu.dot_dimension_numbers<[1], [0], [0], [1], [0, 0, 1, 1], [], []>} : vector<8x8xf32>, vector<8x8xf32>, vector<8x8xf32> -> vector<8x8xf32>
    %15 = tpu.reciprocal %13 {approx = true} : vector<8x1xf32> -> vector<8x1xf32>
    %16 = vector.broadcast %15 : vector<8x1xf32> to vector<8x8xf32>
    %17 = arith.mulf %14, %16 : vector<8x8xf32>
    %c0_14 = arith.constant 0 : index
    %c0_15 = arith.constant 0 : index
    %18 = vector.load %arg7[%c0_14, %c0_15] : memref<8x32xf32, #tpu.memory_space<vmem>>, vector<8x8xf32>
    tpu.vector_store %arg7[%c0_14, %c0_15], %17 {strides = array<i32>} : memref<8x32xf32, #tpu.memory_space<vmem>>, vector<8x8xf32>,
    %c0_16 = arith.constant 0 : index
    %c1 = arith.constant 1 : index
    %c0_17 = arith.constant 0 : index
    %c0_18 = arith.constant 0 : index
    %19 = vector.load %arg1[%c0_16, %c1, %c0_17, %c0_18] : memref<1x4x8x8xf32, #tpu.memory_space<vmem>>, vector<1x1x8x8xf32>
    %20 = vector.shape_cast %19 : vector<1x1x8x8xf32> to vector<8x8xf32>
    %c0_19 = arith.constant 0 : index
    %c1_20 = arith.constant 1 : index
    %c0_21 = arith.constant 0 : index
    %c0_22 = arith.constant 0 : index
    %21 = vector.load %arg2[%c0_19, %c1_20, %c0_21, %c0_22] : memref<1x4x8x8xf32, #tpu.memory_space<vmem>>, vector<1x1x8x8xf32>
    %22 = vector.shape_cast %21 : vector<1x1x8x8xf32> to vector<8x8xf32>
    %c0_23 = arith.constant 0 : index
    %c1_24 = arith.constant 1 : index
    %c0_25 = arith.constant 0 : index
    %c0_26 = arith.constant 0 : index
    %23 = vector.load %arg3[%c0_23, %c1_24, %c0_25, %c0_26] : memref<1x4x8x8xf32, #tpu.memory_space<vmem>>, vector<1x1x8x8xf32>
    %24 = vector.shape_cast %23 : vector<1x1x8x8xf32> to vector<8x8xf32>
    %cst_27 = arith.constant dense<0.000000e+00> : vector<8x8xf32>
    %25 = tpu.matmul %20, %22, %cst_27 {dimension_numbers = #tpu.dot_dimension_numbers<[1], [1], [0], [0], [0, 0, 1, 0], [], []>} : vector<8x8xf32>, vector<8x8xf32>, vector<8x8xf32> -> vector<8x8xf32>
    %cst_28 = arith.constant dense<0xFF800000> : vector<8xf32>
    %26 = vector.multi_reduction <maximumf>, %25, %cst_28 [1] : vector<8x8xf32> to vector<8xf32>
    %27 = vector.shape_cast %26 : vector<8xf32> to vector<8x1xf32>
    %28 = vector.broadcast %27 : vector<8x1xf32> to vector<8x8xf32>
    %29 = arith.subf %25, %28 : vector<8x8xf32>
    %30 = math.exp %29 : vector<8x8xf32>
    %cst_29 = arith.constant dense<0.000000e+00> : vector<8xf32>
    %31 = vector.multi_reduction <add>, %30, %cst_29 [1] : vector<8x8xf32> to vector<8xf32>
    %32 = vector.shape_cast %31 : vector<8xf32> to vector<8x1xf32>
    %cst_30 = arith.constant dense<0.000000e+00> : vector<8x8xf32>
    %33 = tpu.matmul %30, %24, %cst_30 {dimension_numbers = #tpu.dot_dimension_numbers<[1], [0], [0], [1], [0, 0, 1, 1], [], []>} : vector<8x8xf32>, vector<8x8xf32>, vector<8x8xf32> -> vector<8x8xf32>
    %34 = tpu.reciprocal %32 {approx = true} : vector<8x1xf32> -> vector<8x1xf32>
    %35 = vector.broadcast %34 : vector<8x1xf32> to vector<8x8xf32>
    %36 = arith.mulf %33, %35 : vector<8x8xf32>
    %c0_31 = arith.constant 0 : index
    %c8 = arith.constant 8 : index
    %37 = vector.load %arg7[%c0_31, %c8] : memref<8x32xf32, #tpu.memory_space<vmem>>, vector<8x8xf32>
    tpu.vector_store %arg7[%c0_31, %c8], %36 {strides = array<i32>} : memref<8x32xf32, #tpu.memory_space<vmem>>, vector<8x8xf32>,
    %c0_32 = arith.constant 0 : index
    %c2 = arith.constant 2 : index
    %c0_33 = arith.constant 0 : index
    %c0_34 = arith.constant 0 : index
    %38 = vector.load %arg1[%c0_32, %c2, %c0_33, %c0_34] : memref<1x4x8x8xf32, #tpu.memory_space<vmem>>, vector<1x1x8x8xf32>
    %39 = vector.shape_cast %38 : vector<1x1x8x8xf32> to vector<8x8xf32>
    %c0_35 = arith.constant 0 : index
    %c2_36 = arith.constant 2 : index
    %c0_37 = arith.constant 0 : index
    %c0_38 = arith.constant 0 : index
    %40 = vector.load %arg2[%c0_35, %c2_36, %c0_37, %c0_38] : memref<1x4x8x8xf32, #tpu.memory_space<vmem>>, vector<1x1x8x8xf32>
    %41 = vector.shape_cast %40 : vector<1x1x8x8xf32> to vector<8x8xf32>
    %c0_39 = arith.constant 0 : index
    %c2_40 = arith.constant 2 : index
    %c0_41 = arith.constant 0 : index
    %c0_42 = arith.constant 0 : index
    %42 = vector.load %arg3[%c0_39, %c2_40, %c0_41, %c0_42] : memref<1x4x8x8xf32, #tpu.memory_space<vmem>>, vector<1x1x8x8xf32>
    %43 = vector.shape_cast %42 : vector<1x1x8x8xf32> to vector<8x8xf32>
    %cst_43 = arith.constant dense<0.000000e+00> : vector<8x8xf32>
    %44 = tpu.matmul %39, %41, %cst_43 {dimension_numbers = #tpu.dot_dimension_numbers<[1], [1], [0], [0], [0, 0, 1, 0], [], []>} : vector<8x8xf32>, vector<8x8xf32>, vector<8x8xf32> -> vector<8x8xf32>
    %cst_44 = arith.constant dense<0xFF800000> : vector<8xf32>
    %45 = vector.multi_reduction <maximumf>, %44, %cst_44 [1] : vector<8x8xf32> to vector<8xf32>
    %46 = vector.shape_cast %45 : vector<8xf32> to vector<8x1xf32>
    %47 = vector.broadcast %46 : vector<8x1xf32> to vector<8x8xf32>
    %48 = arith.subf %44, %47 : vector<8x8xf32>
    %49 = math.exp %48 : vector<8x8xf32>
    %cst_45 = arith.constant dense<0.000000e+00> : vector<8xf32>
    %50 = vector.multi_reduction <add>, %49, %cst_45 [1] : vector<8x8xf32> to vector<8xf32>
    %51 = vector.shape_cast %50 : vector<8xf32> to vector<8x1xf32>
    %cst_46 = arith.constant dense<0.000000e+00> : vector<8x8xf32>
    %52 = tpu.matmul %49, %43, %cst_46 {dimension_numbers = #tpu.dot_dimension_numbers<[1], [0], [0], [1], [0, 0, 1, 1], [], []>} : vector<8x8xf32>, vector<8x8xf32>, vector<8x8xf32> -> vector<8x8xf32>
    %53 = tpu.reciprocal %51 {approx = true} : vector<8x1xf32> -> vector<8x1xf32>
    %54 = vector.broadcast %53 : vector<8x1xf32> to vector<8x8xf32>
    %55 = arith.mulf %52, %54 : vector<8x8xf32>
    %c0_47 = arith.constant 0 : index
    %c16 = arith.constant 16 : index
    %56 = vector.load %arg7[%c0_47, %c16] : memref<8x32xf32, #tpu.memory_space<vmem>>, vector<8x8xf32>
    tpu.vector_store %arg7[%c0_47, %c16], %55 {strides = array<i32>} : memref<8x32xf32, #tpu.memory_space<vmem>>, vector<8x8xf32>,
    %c0_48 = arith.constant 0 : index
    %c3 = arith.constant 3 : index
    %c0_49 = arith.constant 0 : index
    %c0_50 = arith.constant 0 : index
    %57 = vector.load %arg1[%c0_48, %c3, %c0_49, %c0_50] : memref<1x4x8x8xf32, #tpu.memory_space<vmem>>, vector<1x1x8x8xf32>
    %58 = vector.shape_cast %57 : vector<1x1x8x8xf32> to vector<8x8xf32>
    %c0_51 = arith.constant 0 : index
    %c3_52 = arith.constant 3 : index
    %c0_53 = arith.constant 0 : index
    %c0_54 = arith.constant 0 : index
    %59 = vector.load %arg2[%c0_51, %c3_52, %c0_53, %c0_54] : memref<1x4x8x8xf32, #tpu.memory_space<vmem>>, vector<1x1x8x8xf32>
    %60 = vector.shape_cast %59 : vector<1x1x8x8xf32> to vector<8x8xf32>
    %c0_55 = arith.constant 0 : index
    %c3_56 = arith.constant 3 : index
    %c0_57 = arith.constant 0 : index
    %c0_58 = arith.constant 0 : index
    %61 = vector.load %arg3[%c0_55, %c3_56, %c0_57, %c0_58] : memref<1x4x8x8xf32, #tpu.memory_space<vmem>>, vector<1x1x8x8xf32>
    %62 = vector.shape_cast %61 : vector<1x1x8x8xf32> to vector<8x8xf32>
    %cst_59 = arith.constant dense<0.000000e+00> : vector<8x8xf32>
    %63 = tpu.matmul %58, %60, %cst_59 {dimension_numbers = #tpu.dot_dimension_numbers<[1], [1], [0], [0], [0, 0, 1, 0], [], []>} : vector<8x8xf32>, vector<8x8xf32>, vector<8x8xf32> -> vector<8x8xf32>
    %cst_60 = arith.constant dense<0xFF800000> : vector<8xf32>
    %64 = vector.multi_reduction <maximumf>, %63, %cst_60 [1] : vector<8x8xf32> to vector<8xf32>
    %65 = vector.shape_cast %64 : vector<8xf32> to vector<8x1xf32>
    %66 = vector.broadcast %65 : vector<8x1xf32> to vector<8x8xf32>
    %67 = arith.subf %63, %66 : vector<8x8xf32>
    %68 = math.exp %67 : vector<8x8xf32>
    %cst_61 = arith.constant dense<0.000000e+00> : vector<8xf32>
    %69 = vector.multi_reduction <add>, %68, %cst_61 [1] : vector<8x8xf32> to vector<8xf32>
    %70 = vector.shape_cast %69 : vector<8xf32> to vector<8x1xf32>
    %cst_62 = arith.constant dense<0.000000e+00> : vector<8x8xf32>
    %71 = tpu.matmul %68, %62, %cst_62 {dimension_numbers = #tpu.dot_dimension_numbers<[1], [0], [0], [1], [0, 0, 1, 1], [], []>} : vector<8x8xf32>, vector<8x8xf32>, vector<8x8xf32> -> vector<8x8xf32>
    %72 = tpu.reciprocal %70 {approx = true} : vector<8x1xf32> -> vector<8x1xf32>
    %73 = vector.broadcast %72 : vector<8x1xf32> to vector<8x8xf32>
    %74 = arith.mulf %71, %73 : vector<8x8xf32>
    %c0_63 = arith.constant 0 : index
    %c24 = arith.constant 24 : index
    %75 = vector.load %arg7[%c0_63, %c24] : memref<8x32xf32, #tpu.memory_space<vmem>>, vector<8x8xf32>
    tpu.vector_store %arg7[%c0_63, %c24], %74 {strides = array<i32>} : memref<8x32xf32, #tpu.memory_space<vmem>>, vector<8x8xf32>,
    %c0_64 = arith.constant 0 : index
    %c0_65 = arith.constant 0 : index
    %76 = vector.load %arg7[%c0_64, %c0_65] : memref<8x32xf32, #tpu.memory_space<vmem>>, vector<8x32xf32>
    %c0_66 = arith.constant 0 : index
    %c0_67 = arith.constant 0 : index
    %77 = vector.load %arg4[%c0_66, %c0_67] : memref<32x32xf32, #tpu.memory_space<vmem>>, vector<32x32xf32>
    %cst_68 = arith.constant dense<0.000000e+00> : vector<8x32xf32>
    %78 = tpu.matmul %76, %77, %cst_68 {dimension_numbers = #tpu.dot_dimension_numbers<[1], [0], [0], [1], [0, 0, 1, 1], [], []>} : vector<8x32xf32>, vector<32x32xf32>, vector<8x32xf32> -> vector<8x32xf32>
    %c0_69 = arith.constant 0 : index
    %c0_70 = arith.constant 0 : index
    %79 = vector.load %arg5[%c0_69, %c0_70] : memref<1x32xf32, #tpu.memory_space<vmem>>, vector<1x32xf32>
    %80 = vector.broadcast %79 : vector<1x32xf32> to vector<8x32xf32>
    %81 = arith.addf %78, %80 : vector<8x32xf32>
    %c0_71 = arith.constant 0 : index
    %c0_72 = arith.constant 0 : index
    %c0_73 = arith.constant 0 : index
    %82 = vector.load %arg6[%c0_71, %c0_72, %c0_73] : memref<1x8x32xf32, #tpu.memory_space<vmem>>, vector<1x8x32xf32>
    %83 = vector.shape_cast %82 : vector<1x8x32xf32> to vector<8x32xf32>
    %84 = vector.shape_cast %81 : vector<8x32xf32> to vector<1x8x32xf32>
    tpu.vector_store %arg6[%c0_71, %c0_72, %c0_73], %84 {strides = array<i32>} : memref<1x8x32xf32, #tpu.memory_space<vmem>>, vector<1x8x32xf32>,
    return
  }
  func.func @transform_0(%arg0: i32) -> (i32, i32, i32, i32) {
    %c0_i32 = arith.constant 0 : i32
    %c0_i32_0 = arith.constant 0 : i32
    %c0_i32_1 = arith.constant 0 : i32
    %c0_i32_2 = arith.constant 0 : i32
    return %arg0, %c0_i32, %c0_i32_0, %c0_i32_1 : i32, i32, i32, i32
  }
  func.func @transform_1(%arg0: i32) -> (i32, i32, i32, i32) {
    %c0_i32 = arith.constant 0 : i32
    %c0_i32_0 = arith.constant 0 : i32
    %c0_i32_1 = arith.constant 0 : i32
    %c0_i32_2 = arith.constant 0 : i32
    return %arg0, %c0_i32, %c0_i32_0, %c0_i32_1 : i32, i32, i32, i32
  }
  func.func @transform_2(%arg0: i32) -> (i32, i32, i32, i32) {
    %c0_i32 = arith.constant 0 : i32
    %c0_i32_0 = arith.constant 0 : i32
    %c0_i32_1 = arith.constant 0 : i32
    %c0_i32_2 = arith.constant 0 : i32
    return %arg0, %c0_i32, %c0_i32_0, %c0_i32_1 : i32, i32, i32, i32
  }
  func.func @transform_3(%arg0: i32) -> (i32, i32) {
    %c0_i32 = arith.constant 0 : i32
    %c0_i32_0 = arith.constant 0 : i32
    %c0_i32_1 = arith.constant 0 : i32
    return %c0_i32, %c0_i32_0 : i32, i32
  }
  func.func @transform_4(%arg0: i32) -> (i32, i32) {
    %c0_i32 = arith.constant 0 : i32
    %c0_i32_0 = arith.constant 0 : i32
    %c0_i32_1 = arith.constant 0 : i32
    return %c0_i32, %c0_i32_0 : i32, i32
  }
  func.func @transform_5(%arg0: i32) -> (i32, i32, i32) {
    %c0_i32 = arith.constant 0 : i32
    %c0_i32_0 = arith.constant 0 : i32
    %c0_i32_1 = arith.constant 0 : i32
    return %arg0, %c0_i32, %c0_i32_0 : i32, i32, i32
  }
}

</mosaic_0001>

<llo_original>
// kernel: self_attention.2
$region0: #{self_attention.2}
  #allocation0 [shape = 'u32[]', space=smem, size = 0x4, offset = 0x4, fixed_abs, tag = 'smem constant byte address 0x4 - core index']
  #allocation1 [shape = 'u32[144,128]{1,0:T(1,128)}', space=vmem, size = 0x12000, scoped, tag = 'internal scratch']
  %s0 = inlined_call_operand.hbm [shape: f32[16,32], index: 0, kind: input, shape index: {}]
  %s1 = inlined_call_operand.hbm [shape: f32[32,96], index: 1, kind: input, shape index: {}]
  %s2 = inlined_call_operand.vmem [shape: f32[1,96], index: 2, kind: input, shape index: {}]
  %s3 = inlined_call_operand.vmem [shape: f32[16,96], index: 3, kind: output, shape index: {}]
  %s4 = sld [smem:[#allocation0]]
  $region30: #{self_attention.2} parent=0
    _
  %s6 = ssub.s32 1, %s4
  %s7 = scalar_select 0, %s6, %s4
  $region1: #{self_attention.2} parent=0
    #allocation2 [shape = 'u8[8192]{0}', space=vmem, size = 0x2000, scoped, tag = 'input window, operand 0, single buffered']
    #allocation3 [shape = 's32[1]{0}', space=sflag, size = 0x4, scoped, tag = 'scoped memory for self_attention.2']
    #allocation4 [shape = 'u8[16384]{0}', space=vmem, size = 0x4000, scoped, tag = 'input window, operand 1, single buffered']
    #allocation5 [shape = 's32[1]{0}', space=sflag, size = 0x4, scoped, tag = 'scoped memory for self_attention.2']
    %8 = vsyncpa [#allocation3], 0
    %9 = vsyncpa [#allocation5], 0
    // Predicated region
    $region2: #{self_attention.2} parent=1 // pred_check
      _
    $region3: #{self_attention.2} parent=1 // pred_check_branch
      %11 = sbr.rel (0) target = $region5
    $region4: #{self_attention.2} parent=1 // pred_region
      %s13 = ssub.s32 256, 256
      %14 = vsyncadd [#allocation3], %s13
      %s15 = sshll.u32 [#allocation2], 4
      %s16 = int_to_ptr.vmem [resolvable:$true] %s15
      %21 = dma.hbm_to_vmem [thread:$0]  %s0, 256, %s16, [#allocation3], 128, 128, 8
    $region5: #{self_attention.2} parent=1 // pred_fallthru
      _
    // Predicated region
    $region6: #{self_attention.2} parent=1 // pred_check
      _
    $region7: #{self_attention.2} parent=1 // pred_check_branch
      %23 = sbr.rel (0) target = $region9
    $region8: #{self_attention.2} parent=1 // pred_region
      %s25 = ssub.s32 512, 512
      %26 = vsyncadd [#allocation5], %s25
      %s27 = sshll.u32 [#allocation4], 4
      %s28 = int_to_ptr.vmem [resolvable:$true] %s27
      %33 = dma.hbm_to_vmem [thread:$0]  %s1, 512, %s28, [#allocation5], 128, 128, 8
    $region9: #{self_attention.2} parent=1 // pred_fallthru
      _
    // Predicated region
    $region10: #{self_attention.2} parent=1 // pred_check
      _
    $region11: #{self_attention.2} parent=1 // pred_check_branch
      %35 = sbr.rel (0) target = $region13
    $region12: #{self_attention.2} parent=1 // pred_region
      _
    $region13: #{self_attention.2} parent=1 // pred_fallthru
      _
    // Predicated region
    $region14: #{self_attention.2} parent=1 // pred_check
      _
    $region15: #{self_attention.2} parent=1 // pred_check_branch
      %37 = sbr.rel (0) target = $region17
    $region16: #{self_attention.2} parent=1 // pred_region
      %38 = dma.done [#allocation3], 256
    $region17: #{self_attention.2} parent=1 // pred_fallthru
      _
    // Predicated region
    $region18: #{self_attention.2} parent=1 // pred_check
      _
    $region19: #{self_attention.2} parent=1 // pred_check_branch
      %40 = sbr.rel (0) target = $region21
    $region20: #{self_attention.2} parent=1 // pred_region
      %41 = dma.done [#allocation5], 512
    $region21: #{self_attention.2} parent=1 // pred_fallthru
      _
    %v42 = vld [vmem:[#allocation2] sm:$0xff]
    %v43 = vld [vmem:[#allocation2 + $0x8] sm:$0xff]
    %v44 = vld [vmem:[#allocation4] sm:$0xff]
    %v45 = vld [vmem:[#allocation4 + $0x8] sm:$0xff]
    %v46 = vld [vmem:[#allocation4 + $0x10] sm:$0xff]
    %v47 = vld [vmem:[#allocation4 + $0x18] sm:$0xff]
    %v48 = vld [vmem:[%s2] sm:$0x1]
    %v50 = vlaneseq
    %v51 = vshrl.u32 %v50, 7
    %v52 = vsub.s32 0, %v51
    %v53 = vrot.slane %v48, %v52
    %vm55 = vcmask 261120
    %v57 = vsel %vm55, %v42, 0
    %v60 = vsel %vm55, %v43, 0
    %62 = vmatprep.subr.mxu0 0.0
    %63 = vmatpush1.msra.mxu0 %v44
    %64 = vmatprep.subr.mxu0 0.0
    %65 = vmatpush1.msra.mxu0 %v45
    %66 = vmatprep.subr.mxu0 0.0
    %67 = vmatpush1.msra.mxu0 %v46
    %68 = vmatprep.subr.mxu0 0.0
    %69 = vmatpush1.msra.mxu0 %v47
    %70 = vmatprep.subr.mxu0 0.0
    %71 = vmatpush1.msra.mxu0 0.0
    %72 = vmatprep.subr.mxu0 0.0
    %73 = vmatpush1.msra.mxu0 0.0
    %74 = vmatprep.subr.mxu0 0.0
    %75 = vmatpush1.msra.mxu0 0.0
    %76 = vmatprep.subr.mxu0 0.0
    %77 = vmatpush1.msra.mxu0 0.0
    %78 = vmatprep.subr.mxu0 0.0
    %79 = vmatpush1.msra.mxu0 0.0
    %80 = vmatprep.subr.mxu0 0.0
    %81 = vmatpush1.msra.mxu0 0.0
    %82 = vmatprep.subr.mxu0 0.0
    %83 = vmatpush1.msra.mxu0 0.0
    %84 = vmatprep.subr.mxu0 0.0
    %85 = vmatpush1.msra.mxu0 0.0
    %86 = vmatprep.subr.mxu0 0.0
    %87 = vmatpush1.msra.mxu0 0.0
    %88 = vmatprep.subr.mxu0 0.0
    %89 = vmatpush1.msra.mxu0 0.0
    %90 = vmatprep.subr.mxu0 0.0
    %91 = vmatpush1.msra.mxu0 0.0
    %92 = vmatprep.subr.mxu0 0.0
    %93 = vmatpush1.msra.mxu0 0.0
    %94 = vmatprep.subr.mxu0 0.0
    %95 = vmatpush1.msra.mxu0 0.0
    %96 = vmatprep.subr.mxu0 0.0
    %97 = vmatpush1.msra.mxu0 0.0
    %98 = vmatprep.subr.mxu0 0.0
    %99 = vmatpush1.msra.mxu0 0.0
    %100 = vmatprep.subr.mxu0 0.0
    %101 = vmatpush1.msra.mxu0 0.0
    %102 = vmatprep.subr.mxu0 0.0
    %103 = vmatpush1.msra.mxu0 0.0
    %104 = vmatprep.subr.mxu0 0.0
    %105 = vmatpush1.msra.mxu0 0.0
    %106 = vmatprep.subr.mxu0 0.0
    %107 = vmatpush1.msra.mxu0 0.0
    %108 = vmatprep.subr.mxu0 0.0
    %109 = vmatpush1.msra.mxu0 0.0
    %110 = vmatprep.subr.mxu0 0.0
    %111 = vmatpush1.msra.mxu0 0.0
    %112 = vmatprep.subr.mxu0 0.0
    %113 = vmatpush1.msra.mxu0 0.0
    %114 = vmatprep.subr.mxu0 0.0
    %115 = vmatpush1.msra.mxu0 0.0
    %116 = vmatprep.subr.mxu0 0.0
    %117 = vmatpush1.msra.mxu0 0.0
    %118 = vmatprep.subr.mxu0 0.0
    %119 = vmatpush1.msra.mxu0 0.0
    %120 = vmatprep.subr.mxu0 0.0
    %121 = vmatpush1.msra.mxu0 0.0
    %122 = vmatprep.subr.mxu0 0.0
    %123 = vmatpush1.msra.mxu0 0.0
    %124 = vmatprep.subr.mxu0 0.0
    %125 = vmatpush1.msra.mxu0 0.0
    %126 = vmatprep.mubr.f32.mxu0 0.0
    %127 = vmatmul.mubr.f32.gmra.mrb[0].mxu0 %v57
    %v128 = vpop.f32.mrb[0].mxu0
    %v129 = vadd.f32 %v53, %v128
    %v130 = vpop.f32.mrb[0].mxu0
    %131 = vmatprep.mubr.f32.mxu0 0.0
    %132 = vmatmul.mubr.f32.gmra.mrb[0].mxu0 %v60
    %v133 = vpop.f32.mrb[0].mxu0
    %v134 = vadd.f32 %v53, %v133
    %v135 = vpop.f32.mrb[0].mxu0
    %136 = vdwg.mxu0
    %vm137 = vcmask 785408
    %138 = vst.msk [vmem:[%s3] sm:$0xff] %vm137, %v129
    %139 = vst.msk [vmem:[%s3 + $0x8] sm:$0xff] %vm137, %v134
    // Predicated region
    $region22: #{self_attention.2} parent=1 // pred_check
      _
    $region23: #{self_attention.2} parent=1 // pred_check_branch
      %141 = sbr.rel (0) target = $region25
    $region24: #{self_attention.2} parent=1 // pred_region
      _
    $region25: #{self_attention.2} parent=1 // pred_fallthru
      _
    // Predicated region
    $region26: #{self_attention.2} parent=1 // pred_check
      _
    $region27: #{self_attention.2} parent=1 // pred_check_branch
      %143 = sbr.rel (0) target = $region29
    $region28: #{self_attention.2} parent=1 // pred_region
      _
    $region29: #{self_attention.2} parent=1 // pred_fallthru
      _
    %144 = vsyncpa [#allocation3], 1
    %145 = vsyncpa [#allocation5], 1

// kernel: self_attention.3
$region0: #{self_attention.3}
  #allocation0 [shape = 'u32[]', space=smem, size = 0x4, offset = 0x4, fixed_abs, tag = 'smem constant byte address 0x4 - core index']
  #allocation1 [shape = 'u32[144,128]{1,0:T(1,128)}', space=vmem, size = 0x12000, scoped, tag = 'internal scratch']
  #allocation2 [shape = 'f32[8,32]{1,0:T(8,128)}', space=vmem, size = 0x1000, scoped, tag = 'scratch operand']
  %s0 = inlined_call_operand.vmem [shape: f32[2,4,8,8], index: 0, kind: input, shape index: {}]
  %s1 = inlined_call_operand.vmem [shape: f32[2,4,8,8], index: 1, kind: input, shape index: {}]
  %s2 = inlined_call_operand.vmem [shape: f32[2,4,8,8], index: 2, kind: input, shape index: {}]
  %s3 = inlined_call_operand.vmem [shape: f32[32,32], index: 3, kind: input, shape index: {}]
  %s4 = inlined_call_operand.vmem [shape: f32[1,32], index: 4, kind: input, shape index: {}]
  %s5 = inlined_call_operand.hbm [shape: f32[2,8,32], index: 5, kind: output, shape index: {}]
  %s6 = sld [smem:[#allocation0]]
  $region53: #{self_attention.3} parent=0
    _
  %s8 = ssub.s32 1, %s6
  %s9 = scalar_select 0, %s8, %s6
  $region1: #{self_attention.3} parent=0
    #allocation3 [shape = 'u8[8192]{0}', space=vmem, size = 0x2000, scoped, tag = 'output window, operand 0']
    #allocation4 [shape = 's32[2]{0}', space=sflag, size = 0x8, scoped, tag = 'scoped memory for self_attention.3']
    %10 = vsyncpa [#allocation4], 0
    %s11 = scalar_lea.sflag [#allocation4], 1
    %12 = vsyncpa %s11, 0
    loop: start=0, step=1, limit=4
    $region2: #{self_attention.3} parent=1 // loop_pre_header
      _
    $region3: #{self_attention.3} parent=1 // loop_header
      %s14 = sphi 0, %s18
      %p15 = scmp.ge.s32.totalorder %s14, 4
      %s24 = sphi 0, %s26
      %s27 = sphi 0, %s24
      %s28 = sphi 0, %s27
      %s44 = sphi 0, %s28
      %s50 = sphi 0, %s52
      %s53 = sphi 0, %s50
      %s54 = sphi 0, %s53
      %s70 = sphi 0, %s54
      %s76 = sphi 0, %s78
      %s79 = sphi 0, %s76
      %s80 = sphi 0, %s79
      %s96 = sphi 0, %s80
      %s100 = sphi 0, %s100
      %s102 = sphi 0, %s100
      %s103 = sphi 0, %s102
      %s117 = sphi 0, %s103
      %s121 = sphi 0, %s121
      %s123 = sphi 0, %s121
      %s124 = sphi 0, %s123
      %s138 = sphi 0, %s124
      %s144 = sphi 0, %s146
      %s147 = sphi 0, %s144
      %s148 = sphi 0, %s147
      %s164 = sphi 0, %s148
    $region4: #{self_attention.3} parent=1 // loop_header_branch
      %17 = sbr.rel (%p15) target = $region8
    $region5: #{self_attention.3} parent=1 // loop_body
      %s19 = ssub.s32 %s14, 1
      %s20 = ssub.s32 %s14, 2
      %s21 = sadd.s32 %s14, 1
      %s22 = ssub.s32 %s14, %s21
      %p23 = scmp.eq.s32.totalorder %s22, 0
      %s25 = sadd.s32 %s24, 1
      %s26 = scalar_select %p23, %s24, %s25
      %p29 = pneg %p23
      %p30 = scmp.eq.s32.totalorder %s14, 1
      %p31 = por %p29, %p30
      %p32 = scmp.ne.s32.totalorder %s24, %s27
      %p33 = scmp.eq.s32.totalorder %s14, 0
      %p34 = por %p32, %p33
      %p35 = scmp.ne.s32.totalorder %s24, %s27
      %p36 = scmp.eq.s32.totalorder %s19, 1
      %p37 = por %p35, %p36
      %p38 = scmp.ne.s32.totalorder %s27, %s28
      %p39 = scmp.eq.s32.totalorder %s19, 0
      %p40 = por %p38, %p39
      %p41 = scmp.ne.s32.totalorder %s27, %s28
      %p42 = scmp.eq.s32.totalorder %s20, 1
      %p43 = por %p41, %p42
      %p45 = scmp.ne.s32.totalorder %s28, %s44
      %p46 = scmp.eq.s32.totalorder %s20, 0
      %p47 = por %p45, %p46
      %s48 = ssub.s32 %s14, %s21
      %p49 = scmp.eq.s32.totalorder %s48, 0
      %s51 = sadd.s32 %s50, 1
      %s52 = scalar_select %p49, %s50, %s51
      %p55 = pneg %p49
      %p56 = scmp.eq.s32.totalorder %s14, 1
      %p57 = por %p55, %p56
      %p58 = scmp.ne.s32.totalorder %s50, %s53
      %p59 = scmp.eq.s32.totalorder %s14, 0
      %p60 = por %p58, %p59
      %p61 = scmp.ne.s32.totalorder %s50, %s53
      %p62 = scmp.eq.s32.totalorder %s19, 1
      %p63 = por %p61, %p62
      %p64 = scmp.ne.s32.totalorder %s53, %s54
      %p65 = scmp.eq.s32.totalorder %s19, 0
      %p66 = por %p64, %p65
      %p67 = scmp.ne.s32.totalorder %s53, %s54
      %p68 = scmp.eq.s32.totalorder %s20, 1
      %p69 = por %p67, %p68
      %p71 = scmp.ne.s32.totalorder %s54, %s70
      %p72 = scmp.eq.s32.totalorder %s20, 0
      %p73 = por %p71, %p72
      %s74 = ssub.s32 %s14, %s21
      %p75 = scmp.eq.s32.totalorder %s74, 0
      %s77 = sadd.s32 %s76, 1
      %s78 = scalar_select %p75, %s76, %s77
      %p81 = pneg %p75
      %p82 = scmp.eq.s32.totalorder %s14, 1
      %p83 = por %p81, %p82
      %p84 = scmp.ne.s32.totalorder %s76, %s79
      %p85 = scmp.eq.s32.totalorder %s14, 0
      %p86 = por %p84, %p85
      %p87 = scmp.ne.s32.totalorder %s76, %s79
      %p88 = scmp.eq.s32.totalorder %s19, 1
      %p89 = por %p87, %p88
      %p90 = scmp.ne.s32.totalorder %s79, %s80
      %p91 = scmp.eq.s32.totalorder %s19, 0
      %p92 = por %p90, %p91
      %p93 = scmp.ne.s32.totalorder %s79, %s80
      %p94 = scmp.eq.s32.totalorder %s20, 1
      %p95 = por %p93, %p94
      %p97 = scmp.ne.s32.totalorder %s80, %s96
      %p98 = scmp.eq.s32.totalorder %s20, 0
      %p99 = por %p97, %p98
      %s101 = sadd.s32 %s100, 1
      %p104 = scmp.eq.s32.totalorder %s14, 1
      %p105 = scmp.ne.s32.totalorder %s100, %s102
      %p106 = scmp.eq.s32.totalorder %s14, 0
      %p107 = por %p105, %p106
      %p108 = scmp.ne.s32.totalorder %s100, %s102
      %p109 = scmp.eq.s32.totalorder %s19, 1
      %p110 = por %p108, %p109
      %p111 = scmp.ne.s32.totalorder %s102, %s103
      %p112 = scmp.eq.s32.totalorder %s19, 0
      %p113 = por %p111, %p112
      %p114 = scmp.ne.s32.totalorder %s102, %s103
      %p115 = scmp.eq.s32.totalorder %s20, 1
      %p116 = por %p114, %p115
      %p118 = scmp.ne.s32.totalorder %s103, %s117
      %p119 = scmp.eq.s32.totalorder %s20, 0
      %p120 = por %p118, %p119
      %s122 = sadd.s32 %s121, 1
      %p125 = scmp.eq.s32.totalorder %s14, 1
      %p126 = scmp.ne.s32.totalorder %s121, %s123
      %p127 = scmp.eq.s32.totalorder %s14, 0
      %p128 = por %p126, %p127
      %p129 = scmp.ne.s32.totalorder %s121, %s123
      %p130 = scmp.eq.s32.totalorder %s19, 1
      %p131 = por %p129, %p130
      %p132 = scmp.ne.s32.totalorder %s123, %s124
      %p133 = scmp.eq.s32.totalorder %s19, 0
      %p134 = por %p132, %p133
      %p135 = scmp.ne.s32.totalorder %s123, %s124
      %p136 = scmp.eq.s32.totalorder %s20, 1
      %p137 = por %p135, %p136
      %p139 = scmp.ne.s32.totalorder %s124, %s138
      %p140 = scmp.eq.s32.totalorder %s20, 0
      %p141 = por %p139, %p140
      %s142 = ssub.s32 %s14, %s21
      %p143 = scmp.eq.s32.totalorder %s142, 0
      %s145 = sadd.s32 %s144, 1
      %s146 = scalar_select %p143, %s144, %s145
      %p149 = pneg %p143
      %p150 = scmp.eq.s32.totalorder %s14, 1
      %p151 = por %p149, %p150
      %p152 = scmp.ne.s32.totalorder %s144, %s147
      %p153 = scmp.eq.s32.totalorder %s14, 0
      %p154 = por %p152, %p153
      %p155 = scmp.ne.s32.totalorder %s144, %s147
      %p156 = scmp.eq.s32.totalorder %s19, 1
      %p157 = por %p155, %p156
      %p158 = scmp.ne.s32.totalorder %s147, %s148
      %p159 = scmp.eq.s32.totalorder %s19, 0
      %p160 = por %p158, %p159
      %p161 = scmp.ne.s32.totalorder %s147, %s148
      %p162 = scmp.eq.s32.totalorder %s20, 1
      %p163 = por %p161, %p162
      %p165 = scmp.ne.s32.totalorder %s148, %s164
      %p166 = scmp.eq.s32.totalorder %s20, 0
      %p167 = por %p165, %p166
      %p168 = scmp.le.s32.totalorder 1, %s14
      %p169 = scmp.lt.s32.totalorder %s14, 3
      %p170 = pnand %p168, %p169
      %p171 = pneg %p170
      // Predicated region
      $region9: #{self_attention.3} parent=5 // pred_check
        _
      $region10: #{self_attention.3} parent=5 // pred_check_branch
        %173 = sbr.rel (%p170) target = $region12
      $region11: #{self_attention.3} parent=5 // pred_region
        %s174 = ssub.s32 %s14, 1
        // Predicated region
        $region13: #{self_attention.3} parent=11 // pred_check
          %p175 = pneg %p113
        $region14: #{self_attention.3} parent=11 // pred_check_branch
          %177 = sbr.rel (%p175) target = $region16
        $region15: #{self_attention.3} parent=11 // pred_region
          _
        $region16: #{self_attention.3} parent=11 // pred_fallthru
          _
        // Predicated region
        $region17: #{self_attention.3} parent=11 // pred_check
          %p178 = pneg %p134
        $region18: #{self_attention.3} parent=11 // pred_check_branch
          %180 = sbr.rel (%p178) target = $region20
        $region19: #{self_attention.3} parent=11 // pred_region
          _
        $region20: #{self_attention.3} parent=11 // pred_fallthru
          _
      $region12: #{self_attention.3} parent=5 // pred_fallthru
        _
      %p181 = scmp.lt.s32.totalorder %s14, 2
      // Predicated region
      $region21: #{self_attention.3} parent=5 // pred_check
        %p182 = pneg %p181
      $region22: #{self_attention.3} parent=5 // pred_check_branch
        %184 = sbr.rel (%p182) target = $region24
      $region23: #{self_attention.3} parent=5 // pred_region
        // Predicated region
        $region25: #{self_attention.3} parent=23 // pred_check
          %p185 = pneg %p34
        $region26: #{self_attention.3} parent=23 // pred_check_branch
          %187 = sbr.rel (%p185) target = $region28
        $region27: #{self_attention.3} parent=23 // pred_region
          %p188 = scmp.lt.s32.totalorder %s14, 1
          %s189 = scalar_select %p188, %s14, 1
          %s190 = smul.addr %s189, 4
          %s191 = smul.addr %s190, 8
          %s192 = scalar_lea.vmem %s0, %s191
        $region28: #{self_attention.3} parent=23 // pred_fallthru
          _
        // Predicated region
        $region29: #{self_attention.3} parent=23 // pred_check
          %p193 = pneg %p60
        $region30: #{self_attention.3} parent=23 // pred_check_branch
          %195 = sbr.rel (%p193) target = $region32
        $region31: #{self_attention.3} parent=23 // pred_region
          %p196 = scmp.lt.s32.totalorder %s14, 1
          %s197 = scalar_select %p196, %s14, 1
          %s198 = smul.addr %s197, 4
          %s199 = smul.addr %s198, 8
          %s200 = scalar_lea.vmem %s1, %s199
        $region32: #{self_attention.3} parent=23 // pred_fallthru
          _
        // Predicated region
        $region33: #{self_attention.3} parent=23 // pred_check
          %p201 = pneg %p86
        $region34: #{self_attention.3} parent=23 // pred_check_branch
          %203 = sbr.rel (%p201) target = $region36
        $region35: #{self_attention.3} parent=23 // pred_region
          %p204 = scmp.lt.s32.totalorder %s14, 1
          %s205 = scalar_select %p204, %s14, 1
          %s206 = smul.addr %s205, 4
          %s207 = smul.addr %s206, 8
          %s208 = scalar_lea.vmem %s2, %s207
        $region36: #{self_attention.3} parent=23 // pred_fallthru
          _
      $region24: #{self_attention.3} parent=5 // pred_fallthru
        _
      %p209 = scmp.le.s32.totalorder 1, %s14
      %p210 = scmp.lt.s32.totalorder %s14, 3
      %p211 = pnand %p209, %p210
      %p212 = pneg %p211
      // Predicated region
      $region37: #{self_attention.3} parent=5 // pred_check
        _
      $region38: #{self_attention.3} parent=5 // pred_check_branch
        %214 = sbr.rel (%p211) target = $region40
      $region39: #{self_attention.3} parent=5 // pred_region
        %s215 = ssub.s32 %s14, 1
        %p216 = scmp.lt.s32.totalorder %s19, 1
        %s217 = scalar_select %p216, %s19, 1
        %s218 = smul.addr %s217, 4
        %s219 = smul.addr %s218, 8
        %s220 = scalar_lea.vmem %s0, %s219
        %p221 = pneg %p40
        %p222 = pneg %p37
        %p223 = scmp.lt.s32.totalorder %s19, 1
        %s224 = scalar_select %p223, %s19, 1
        %s225 = smul.addr %s224, 4
        %s226 = smul.addr %s225, 8
        %s227 = scalar_lea.vmem %s1, %s226
        %p228 = pneg %p66
        %p229 = pneg %p63
        %p230 = scmp.lt.s32.totalorder %s19, 1
        %s231 = scalar_select %p230, %s19, 1
        %s232 = smul.addr %s231, 4
        %s233 = smul.addr %s232, 8
        %s234 = scalar_lea.vmem %s2, %s233
        %p235 = pneg %p92
        %p236 = pneg %p89
        %p237 = pneg %p113
        %p238 = pneg %p110
        %p239 = pneg %p134
        %p240 = pneg %p131
        %p241 = pneg %p160
        %p242 = pneg %p157
        %s243 = sand.u32 %s147, 1
        %s244 = scalar_lea.sflag [#allocation4], %s243
        %s245 = sand.u32 %s147, 1
        %s246 = smul.addr %s245, 8
        %s247 = scalar_lea.vmem [#allocation3], %s246
        %p248 = scmp.lt.s32.totalorder %s19, 1
        %s249 = scalar_select %p248, %s19, 1
        %s250 = smul.addr %s249, 4
        %s251 = smul.addr %s250, 8
        %s252 = scalar_lea.vmem %s0, %s251
        %p253 = scmp.lt.s32.totalorder %s19, 1
        %s254 = scalar_select %p253, %s19, 1
        %s255 = smul.addr %s254, 4
        %s256 = smul.addr %s255, 8
        %s257 = scalar_lea.vmem %s1, %s256
        %p258 = scmp.lt.s32.totalorder %s19, 1
        %s259 = scalar_select %p258, %s19, 1
        %s260 = smul.addr %s259, 4
        %s261 = smul.addr %s260, 8
        %s262 = scalar_lea.vmem %s2, %s261
        %v263 = vld [vmem:[%s252] sm:$0xff]
        %v264 = vld [vmem:[%s257] sm:$0xff]
        %v265 = vld [vmem:[%s262] sm:$0xff]
        %vm266 = vcmask 64512
        %v268 = vsel %vm266, %v263, 0
        %v271 = vsel %vm266, %v264, 0
        %273 = vmatprep.subr.mxu0 0.0
        %274 = vmatpush1.xpose.msra.mxu0 %v271
        %275 = vmatprep.subr.mxu0 0.0
        %276 = vmatpush1.xpose.msra.mxu0 0.0
        %277 = vmatprep.subr.mxu0 0.0
        %278 = vmatpush1.xpose.msra.mxu0 0.0
        %279 = vmatprep.subr.mxu0 0.0
        %280 = vmatpush1.xpose.msra.mxu0 0.0
        %281 = vmatprep.subr.mxu0 0.0
        %282 = vmatpush1.xpose.msra.mxu0 0.0
        %283 = vmatprep.subr.mxu0 0.0
        %284 = vmatpush1.xpose.msra.mxu0 0.0
        %285 = vmatprep.subr.mxu0 0.0
        %286 = vmatpush1.xpose.msra.mxu0 0.0
        %287 = vmatprep.subr.mxu0 0.0
        %288 = vmatpush1.xpose.msra.mxu0 0.0
        %289 = vmatprep.subr.mxu0 0.0
        %290 = vmatpush1.xpose.msra.mxu0 0.0
        %291 = vmatprep.subr.mxu0 0.0
        %292 = vmatpush1.xpose.msra.mxu0 0.0
        %293 = vmatprep.subr.mxu0 0.0
        %294 = vmatpush1.xpose.msra.mxu0 0.0
        %295 = vmatprep.subr.mxu0 0.0
        %296 = vmatpush1.xpose.msra.mxu0 0.0
        %297 = vmatprep.subr.mxu0 0.0
        %298 = vmatpush1.xpose.msra.mxu0 0.0
        %299 = vmatprep.subr.mxu0 0.0
        %300 = vmatpush1.xpose.msra.mxu0 0.0
        %301 = vmatprep.subr.mxu0 0.0
        %302 = vmatpush1.xpose.msra.mxu0 0.0
        %303 = vmatprep.subr.mxu0 0.0
        %304 = vmatpush1.xpose.msra.mxu0 0.0
        %305 = vmatprep.subr.mxu0 0.0
        %306 = vmatpush1.xpose.msra.mxu0 0.0
        %307 = vmatprep.subr.mxu0 0.0
        %308 = vmatpush1.xpose.msra.mxu0 0.0
        %309 = vmatprep.subr.mxu0 0.0
        %310 = vmatpush1.xpose.msra.mxu0 0.0
        %311 = vmatprep.subr.mxu0 0.0
        %312 = vmatpush1.xpose.msra.mxu0 0.0
        %313 = vmatprep.subr.mxu0 0.0
        %314 = vmatpush1.xpose.msra.mxu0 0.0
        %315 = vmatprep.subr.mxu0 0.0
        %316 = vmatpush1.xpose.msra.mxu0 0.0
        %317 = vmatprep.subr.mxu0 0.0
        %318 = vmatpush1.xpose.msra.mxu0 0.0
        %319 = vmatprep.subr.mxu0 0.0
        %320 = vmatpush1.xpose.msra.mxu0 0.0
        %321 = vmatprep.subr.mxu0 0.0
        %322 = vmatpush1.xpose.msra.mxu0 0.0
        %323 = vmatprep.subr.mxu0 0.0
        %324 = vmatpush1.xpose.msra.mxu0 0.0
        %325 = vmatprep.subr.mxu0 0.0
        %326 = vmatpush1.xpose.msra.mxu0 0.0
        %327 = vmatprep.subr.mxu0 0.0
        %328 = vmatpush1.xpose.msra.mxu0 0.0
        %329 = vmatprep.subr.mxu0 0.0
        %330 = vmatpush1.xpose.msra.mxu0 0.0
        %331 = vmatprep.subr.mxu0 0.0
        %332 = vmatpush1.xpose.msra.mxu0 0.0
        %333 = vmatprep.subr.mxu0 0.0
        %334 = vmatpush1.xpose.msra.mxu0 0.0
        %335 = vmatprep.subr.mxu0 0.0
        %336 = vmatpush1.xpose.msra.mxu0 0.0
        %337 = vmatprep.mubr.f32.mxu0 0.0
        %338 = vmatmul.mubr.f32.gmra.mrb[0].mxu0 %v268
        %v339 = vpop.f32.mrb[0].mxu0
        %v340 = vadd.f32 0.0, %v339
        %v341 = vpop.f32.mrb[0].mxu0
        %342 = vdwg.mxu0
        %v343 = vsel %vm266, %v340, -inf
        %344 = vmax.xlane.f32.xlu0 %v343
        %v345 = vpop.xlane.xlu0 %344
        %v346 = vsub.f32 %v340, %v345
        %v347 = vmul.f32 %v346, 1.442695
        %v348 = vpow.pop %v347
        %v349 = vsel %vm266, %v348, 0.0
        %350 = vadd.xlane.f32.xlu0 %v349
        %v351 = vpop.xlane.xlu0 %350
        %v353 = vsel %vm266, %v348, 0
        %355 = vmatprep.subr.mxu0 0.0
        %356 = vmatpush1.msra.mxu0 %v265
        %357 = vmatprep.subr.mxu0 0.0
        %358 = vmatpush1.msra.mxu0 0.0
        %359 = vmatprep.subr.mxu0 0.0
        %360 = vmatpush1.msra.mxu0 0.0
        %361 = vmatprep.subr.mxu0 0.0
        %362 = vmatpush1.msra.mxu0 0.0
        %363 = vmatprep.subr.mxu0 0.0
        %364 = vmatpush1.msra.mxu0 0.0
        %365 = vmatprep.subr.mxu0 0.0
        %366 = vmatpush1.msra.mxu0 0.0
        %367 = vmatprep.subr.mxu0 0.0
        %368 = vmatpush1.msra.mxu0 0.0
        %369 = vmatprep.subr.mxu0 0.0
        %370 = vmatpush1.msra.mxu0 0.0
        %371 = vmatprep.subr.mxu0 0.0
        %372 = vmatpush1.msra.mxu0 0.0
        %373 = vmatprep.subr.mxu0 0.0
        %374 = vmatpush1.msra.mxu0 0.0
        %375 = vmatprep.subr.mxu0 0.0
        %376 = vmatpush1.msra.mxu0 0.0
        %377 = vmatprep.subr.mxu0 0.0
        %378 = vmatpush1.msra.mxu0 0.0
        %379 = vmatprep.subr.mxu0 0.0
        %380 = vmatpush1.msra.mxu0 0.0
        %381 = vmatprep.subr.mxu0 0.0
        %382 = vmatpush1.msra.mxu0 0.0
        %383 = vmatprep.subr.mxu0 0.0
        %384 = vmatpush1.msra.mxu0 0.0
        %385 = vmatprep.subr.mxu0 0.0
        %386 = vmatpush1.msra.mxu0 0.0
        %387 = vmatprep.subr.mxu0 0.0
        %388 = vmatpush1.msra.mxu0 0.0
        %389 = vmatprep.subr.mxu0 0.0
        %390 = vmatpush1.msra.mxu0 0.0
        %391 = vmatprep.subr.mxu0 0.0
        %392 = vmatpush1.msra.mxu0 0.0
        %393 = vmatprep.subr.mxu0 0.0
        %394 = vmatpush1.msra.mxu0 0.0
        %395 = vmatprep.subr.mxu0 0.0
        %396 = vmatpush1.msra.mxu0 0.0
        %397 = vmatprep.subr.mxu0 0.0
        %398 = vmatpush1.msra.mxu0 0.0
        %399 = vmatprep.subr.mxu0 0.0
        %400 = vmatpush1.msra.mxu0 0.0
        %401 = vmatprep.subr.mxu0 0.0
        %402 = vmatpush1.msra.mxu0 0.0
        %403 = vmatprep.subr.mxu0 0.0
        %404 = vmatpush1.msra.mxu0 0.0
        %405 = vmatprep.subr.mxu0 0.0
        %406 = vmatpush1.msra.mxu0 0.0
        %407 = vmatprep.subr.mxu0 0.0
        %408 = vmatpush1.msra.mxu0 0.0
        %409 = vmatprep.subr.mxu0 0.0
        %410 = vmatpush1.msra.mxu0 0.0
        %411 = vmatprep.subr.mxu0 0.0
        %412 = vmatpush1.msra.mxu0 0.0
        %413 = vmatprep.subr.mxu0 0.0
        %414 = vmatpush1.msra.mxu0 0.0
        %415 = vmatprep.subr.mxu0 0.0
        %416 = vmatpush1.msra.mxu0 0.0
        %417 = vmatprep.subr.mxu0 0.0
        %418 = vmatpush1.msra.mxu0 0.0
        %419 = vmatprep.mubr.f32.mxu0 0.0
        %420 = vmatmul.mubr.f32.gmra.mrb[0].mxu0 %v353
        %v421 = vpop.f32.mrb[0].mxu0
        %v422 = vadd.f32 0.0, %v421
        %v423 = vpop.f32.mrb[0].mxu0
        %424 = vdwg.mxu0
        %v425 = vrcp.pop %v351
        %v426 = vmul.f32 %v422, %v425
        %427 = vst.msk [vmem:[#allocation2] sm:$0xff] %vm266, %v426
        %s428 = scalar_lea.vmem %s252, 8
        %v429 = vld [vmem:[%s428] sm:$0xff]
        %s430 = scalar_lea.vmem %s257, 8
        %v431 = vld [vmem:[%s430] sm:$0xff]
        %s432 = scalar_lea.vmem %s262, 8
        %v433 = vld [vmem:[%s432] sm:$0xff]
        %v435 = vsel %vm266, %v429, 0
        %v438 = vsel %vm266, %v431, 0
        %440 = vmatprep.subr.mxu0 0.0
        %441 = vmatpush1.xpose.msra.mxu0 %v438
        %442 = vmatprep.subr.mxu0 0.0
        %443 = vmatpush1.xpose.msra.mxu0 0.0
        %444 = vmatprep.subr.mxu0 0.0
        %445 = vmatpush1.xpose.msra.mxu0 0.0
        %446 = vmatprep.subr.mxu0 0.0
        %447 = vmatpush1.xpose.msra.mxu0 0.0
        %448 = vmatprep.subr.mxu0 0.0
        %449 = vmatpush1.xpose.msra.mxu0 0.0
        %450 = vmatprep.subr.mxu0 0.0
        %451 = vmatpush1.xpose.msra.mxu0 0.0
        %452 = vmatprep.subr.mxu0 0.0
        %453 = vmatpush1.xpose.msra.mxu0 0.0
        %454 = vmatprep.subr.mxu0 0.0
        %455 = vmatpush1.xpose.msra.mxu0 0.0
        %456 = vmatprep.subr.mxu0 0.0
        %457 = vmatpush1.xpose.msra.mxu0 0.0
        %458 = vmatprep.subr.mxu0 0.0
        %459 = vmatpush1.xpose.msra.mxu0 0.0
        %460 = vmatprep.subr.mxu0 0.0
        %461 = vmatpush1.xpose.msra.mxu0 0.0
        %462 = vmatprep.subr.mxu0 0.0
        %463 = vmatpush1.xpose.msra.mxu0 0.0
        %464 = vmatprep.subr.mxu0 0.0
        %465 = vmatpush1.xpose.msra.mxu0 0.0
        %466 = vmatprep.subr.mxu0 0.0
        %467 = vmatpush1.xpose.msra.mxu0 0.0
        %468 = vmatprep.subr.mxu0 0.0
        %469 = vmatpush1.xpose.msra.mxu0 0.0
        %470 = vmatprep.subr.mxu0 0.0
        %471 = vmatpush1.xpose.msra.mxu0 0.0
        %472 = vmatprep.subr.mxu0 0.0
        %473 = vmatpush1.xpose.msra.mxu0 0.0
        %474 = vmatprep.subr.mxu0 0.0
        %475 = vmatpush1.xpose.msra.mxu0 0.0
        %476 = vmatprep.subr.mxu0 0.0
        %477 = vmatpush1.xpose.msra.mxu0 0.0
        %478 = vmatprep.subr.mxu0 0.0
        %479 = vmatpush1.xpose.msra.mxu0 0.0
        %480 = vmatprep.subr.mxu0 0.0
        %481 = vmatpush1.xpose.msra.mxu0 0.0
        %482 = vmatprep.subr.mxu0 0.0
        %483 = vmatpush1.xpose.msra.mxu0 0.0
        %484 = vmatprep.subr.mxu0 0.0
        %485 = vmatpush1.xpose.msra.mxu0 0.0
        %486 = vmatprep.subr.mxu0 0.0
        %487 = vmatpush1.xpose.msra.mxu0 0.0
        %488 = vmatprep.subr.mxu0 0.0
        %489 = vmatpush1.xpose.msra.mxu0 0.0
        %490 = vmatprep.subr.mxu0 0.0
        %491 = vmatpush1.xpose.msra.mxu0 0.0
        %492 = vmatprep.subr.mxu0 0.0
        %493 = vmatpush1.xpose.msra.mxu0 0.0
        %494 = vmatprep.subr.mxu0 0.0
        %495 = vmatpush1.xpose.msra.mxu0 0.0
        %496 = vmatprep.subr.mxu0 0.0
        %497 = vmatpush1.xpose.msra.mxu0 0.0
        %498 = vmatprep.subr.mxu0 0.0
        %499 = vmatpush1.xpose.msra.mxu0 0.0
        %500 = vmatprep.subr.mxu0 0.0
        %501 = vmatpush1.xpose.msra.mxu0 0.0
        %502 = vmatprep.subr.mxu0 0.0
        %503 = vmatpush1.xpose.msra.mxu0 0.0
        %504 = vmatprep.mubr.f32.mxu0 0.0
        %505 = vmatmul.mubr.f32.gmra.mrb[0].mxu0 %v435
        %v506 = vpop.f32.mrb[0].mxu0
        %v507 = vadd.f32 0.0, %v506
        %v508 = vpop.f32.mrb[0].mxu0
        %509 = vdwg.mxu0
        %v510 = vsel %vm266, %v507, -inf
        %511 = vmax.xlane.f32.xlu0 %v510
        %v512 = vpop.xlane.xlu0 %511
        %v513 = vsub.f32 %v507, %v512
        %v514 = vmul.f32 %v513, 1.442695
        %v515 = vpow.pop %v514
        %v516 = vsel %vm266, %v515, 0.0
        %517 = vadd.xlane.f32.xlu0 %v516
        %v518 = vpop.xlane.xlu0 %517
        %v520 = vsel %vm266, %v515, 0
        %522 = vmatprep.subr.mxu0 0.0
        %523 = vmatpush1.msra.mxu0 %v433
        %524 = vmatprep.subr.mxu0 0.0
        %525 = vmatpush1.msra.mxu0 0.0
        %526 = vmatprep.subr.mxu0 0.0
        %527 = vmatpush1.msra.mxu0 0.0
        %528 = vmatprep.subr.mxu0 0.0
        %529 = vmatpush1.msra.mxu0 0.0
        %530 = vmatprep.subr.mxu0 0.0
        %531 = vmatpush1.msra.mxu0 0.0
        %532 = vmatprep.subr.mxu0 0.0
        %533 = vmatpush1.msra.mxu0 0.0
        %534 = vmatprep.subr.mxu0 0.0
        %535 = vmatpush1.msra.mxu0 0.0
        %536 = vmatprep.subr.mxu0 0.0
        %537 = vmatpush1.msra.mxu0 0.0
        %538 = vmatprep.subr.mxu0 0.0
        %539 = vmatpush1.msra.mxu0 0.0
        %540 = vmatprep.subr.mxu0 0.0
        %541 = vmatpush1.msra.mxu0 0.0
        %542 = vmatprep.subr.mxu0 0.0
        %543 = vmatpush1.msra.mxu0 0.0
        %544 = vmatprep.subr.mxu0 0.0
        %545 = vmatpush1.msra.mxu0 0.0
        %546 = vmatprep.subr.mxu0 0.0
        %547 = vmatpush1.msra.mxu0 0.0
        %548 = vmatprep.subr.mxu0 0.0
        %549 = vmatpush1.msra.mxu0 0.0
        %550 = vmatprep.subr.mxu0 0.0
        %551 = vmatpush1.msra.mxu0 0.0
        %552 = vmatprep.subr.mxu0 0.0
        %553 = vmatpush1.msra.mxu0 0.0
        %554 = vmatprep.subr.mxu0 0.0
        %555 = vmatpush1.msra.mxu0 0.0
        %556 = vmatprep.subr.mxu0 0.0
        %557 = vmatpush1.msra.mxu0 0.0
        %558 = vmatprep.subr.mxu0 0.0
        %559 = vmatpush1.msra.mxu0 0.0
        %560 = vmatprep.subr.mxu0 0.0
        %561 = vmatpush1.msra.mxu0 0.0
        %562 = vmatprep.subr.mxu0 0.0
        %563 = vmatpush1.msra.mxu0 0.0
        %564 = vmatprep.subr.mxu0 0.0
        %565 = vmatpush1.msra.mxu0 0.0
        %566 = vmatprep.subr.mxu0 0.0
        %567 = vmatpush1.msra.mxu0 0.0
        %568 = vmatprep.subr.mxu0 0.0
        %569 = vmatpush1.msra.mxu0 0.0
        %570 = vmatprep.subr.mxu0 0.0
        %571 = vmatpush1.msra.mxu0 0.0
        %572 = vmatprep.subr.mxu0 0.0
        %573 = vmatpush1.msra.mxu0 0.0
        %574 = vmatprep.subr.mxu0 0.0
        %575 = vmatpush1.msra.mxu0 0.0
        %576 = vmatprep.subr.mxu0 0.0
        %577 = vmatpush1.msra.mxu0 0.0
        %578 = vmatprep.subr.mxu0 0.0
        %579 = vmatpush1.msra.mxu0 0.0
        %580 = vmatprep.subr.mxu0 0.0
        %581 = vmatpush1.msra.mxu0 0.0
        %582 = vmatprep.subr.mxu0 0.0
        %583 = vmatpush1.msra.mxu0 0.0
        %584 = vmatprep.subr.mxu0 0.0
        %585 = vmatpush1.msra.mxu0 0.0
        %586 = vmatprep.mubr.f32.mxu0 0.0
        %587 = vmatmul.mubr.f32.gmra.mrb[0].mxu0 %v520
        %v588 = vpop.f32.mrb[0].mxu0
        %v589 = vadd.f32 0.0, %v588
        %v590 = vpop.f32.mrb[0].mxu0
        %591 = vdwg.mxu0
        %v592 = vrcp.pop %v518
        %v593 = vmul.f32 %v589, %v592
        %595 = vrot.lane.b32.xlu0 %v593, 8
        %v596 = vpop.permute.xlu0 %595
        %vm598 = vcmask 130112
        %599 = vst.msk [vmem:[#allocation2] sm:$0xff] %vm598, %v596
        %s600 = scalar_lea.vmem %s252, 16
        %v601 = vld [vmem:[%s600] sm:$0xff]
        %s602 = scalar_lea.vmem %s257, 16
        %v603 = vld [vmem:[%s602] sm:$0xff]
        %s604 = scalar_lea.vmem %s262, 16
        %v605 = vld [vmem:[%s604] sm:$0xff]
        %v607 = vsel %vm266, %v601, 0
        %v610 = vsel %vm266, %v603, 0
        %612 = vmatprep.subr.mxu0 0.0
        %613 = vmatpush1.xpose.msra.mxu0 %v610
        %614 = vmatprep.subr.mxu0 0.0
        %615 = vmatpush1.xpose.msra.mxu0 0.0
        %616 = vmatprep.subr.mxu0 0.0
        %617 = vmatpush1.xpose.msra.mxu0 0.0
        %618 = vmatprep.subr.mxu0 0.0
        %619 = vmatpush1.xpose.msra.mxu0 0.0
        %620 = vmatprep.subr.mxu0 0.0
        %621 = vmatpush1.xpose.msra.mxu0 0.0
        %622 = vmatprep.subr.mxu0 0.0
        %623 = vmatpush1.xpose.msra.mxu0 0.0
        %624 = vmatprep.subr.mxu0 0.0
        %625 = vmatpush1.xpose.msra.mxu0 0.0
        %626 = vmatprep.subr.mxu0 0.0
        %627 = vmatpush1.xpose.msra.mxu0 0.0
        %628 = vmatprep.subr.mxu0 0.0
        %629 = vmatpush1.xpose.msra.mxu0 0.0
        %630 = vmatprep.subr.mxu0 0.0
        %631 = vmatpush1.xpose.msra.mxu0 0.0
        %632 = vmatprep.subr.mxu0 0.0
        %633 = vmatpush1.xpose.msra.mxu0 0.0
        %634 = vmatprep.subr.mxu0 0.0
        %635 = vmatpush1.xpose.msra.mxu0 0.0
        %636 = vmatprep.subr.mxu0 0.0
        %637 = vmatpush1.xpose.msra.mxu0 0.0
        %638 = vmatprep.subr.mxu0 0.0
        %639 = vmatpush1.xpose.msra.mxu0 0.0
        %640 = vmatprep.subr.mxu0 0.0
        %641 = vmatpush1.xpose.msra.mxu0 0.0
        %642 = vmatprep.subr.mxu0 0.0
        %643 = vmatpush1.xpose.msra.mxu0 0.0
        %644 = vmatprep.subr.mxu0 0.0
        %645 = vmatpush1.xpose.msra.mxu0 0.0
        %646 = vmatprep.subr.mxu0 0.0
        %647 = vmatpush1.xpose.msra.mxu0 0.0
        %648 = vmatprep.subr.mxu0 0.0
        %649 = vmatpush1.xpose.msra.mxu0 0.0
        %650 = vmatprep.subr.mxu0 0.0
        %651 = vmatpush1.xpose.msra.mxu0 0.0
        %652 = vmatprep.subr.mxu0 0.0
        %653 = vmatpush1.xpose.msra.mxu0 0.0
        %654 = vmatprep.subr.mxu0 0.0
        %655 = vmatpush1.xpose.msra.mxu0 0.0
        %656 = vmatprep.subr.mxu0 0.0
        %657 = vmatpush1.xpose.msra.mxu0 0.0
        %658 = vmatprep.subr.mxu0 0.0
        %659 = vmatpush1.xpose.msra.mxu0 0.0
        %660 = vmatprep.subr.mxu0 0.0
        %661 = vmatpush1.xpose.msra.mxu0 0.0
        %662 = vmatprep.subr.mxu0 0.0
        %663 = vmatpush1.xpose.msra.mxu0 0.0
        %664 = vmatprep.subr.mxu0 0.0
        %665 = vmatpush1.xpose.msra.mxu0 0.0
        %666 = vmatprep.subr.mxu0 0.0
        %667 = vmatpush1.xpose.msra.mxu0 0.0
        %668 = vmatprep.subr.mxu0 0.0
        %669 = vmatpush1.xpose.msra.mxu0 0.0
        %670 = vmatprep.subr.mxu0 0.0
        %671 = vmatpush1.xpose.msra.mxu0 0.0
        %672 = vmatprep.subr.mxu0 0.0
        %673 = vmatpush1.xpose.msra.mxu0 0.0
        %674 = vmatprep.subr.mxu0 0.0
        %675 = vmatpush1.xpose.msra.mxu0 0.0
        %676 = vmatprep.mubr.f32.mxu0 0.0
        %677 = vmatmul.mubr.f32.gmra.mrb[0].mxu0 %v607
        %v678 = vpop.f32.mrb[0].mxu0
        %v679 = vadd.f32 0.0, %v678
        %v680 = vpop.f32.mrb[0].mxu0
        %681 = vdwg.mxu0
        %v682 = vsel %vm266, %v679, -inf
        %683 = vmax.xlane.f32.xlu0 %v682
        %v684 = vpop.xlane.xlu0 %683
        %v685 = vsub.f32 %v679, %v684
        %v686 = vmul.f32 %v685, 1.442695
        %v687 = vpow.pop %v686
        %v688 = vsel %vm266, %v687, 0.0
        %689 = vadd.xlane.f32.xlu0 %v688
        %v690 = vpop.xlane.xlu0 %689
        %v692 = vsel %vm266, %v687, 0
        %694 = vmatprep.subr.mxu0 0.0
        %695 = vmatpush1.msra.mxu0 %v605
        %696 = vmatprep.subr.mxu0 0.0
        %697 = vmatpush1.msra.mxu0 0.0
        %698 = vmatprep.subr.mxu0 0.0
        %699 = vmatpush1.msra.mxu0 0.0
        %700 = vmatprep.subr.mxu0 0.0
        %701 = vmatpush1.msra.mxu0 0.0
        %702 = vmatprep.subr.mxu0 0.0
        %703 = vmatpush1.msra.mxu0 0.0
        %704 = vmatprep.subr.mxu0 0.0
        %705 = vmatpush1.msra.mxu0 0.0
        %706 = vmatprep.subr.mxu0 0.0
        %707 = vmatpush1.msra.mxu0 0.0
        %708 = vmatprep.subr.mxu0 0.0
        %709 = vmatpush1.msra.mxu0 0.0
        %710 = vmatprep.subr.mxu0 0.0
        %711 = vmatpush1.msra.mxu0 0.0
        %712 = vmatprep.subr.mxu0 0.0
        %713 = vmatpush1.msra.mxu0 0.0
        %714 = vmatprep.subr.mxu0 0.0
        %715 = vmatpush1.msra.mxu0 0.0
        %716 = vmatprep.subr.mxu0 0.0
        %717 = vmatpush1.msra.mxu0 0.0
        %718 = vmatprep.subr.mxu0 0.0
        %719 = vmatpush1.msra.mxu0 0.0
        %720 = vmatprep.subr.mxu0 0.0
        %721 = vmatpush1.msra.mxu0 0.0
        %722 = vmatprep.subr.mxu0 0.0
        %723 = vmatpush1.msra.mxu0 0.0
        %724 = vmatprep.subr.mxu0 0.0
        %725 = vmatpush1.msra.mxu0 0.0
        %726 = vmatprep.subr.mxu0 0.0
        %727 = vmatpush1.msra.mxu0 0.0
        %728 = vmatprep.subr.mxu0 0.0
        %729 = vmatpush1.msra.mxu0 0.0
        %730 = vmatprep.subr.mxu0 0.0
        %731 = vmatpush1.msra.mxu0 0.0
        %732 = vmatprep.subr.mxu0 0.0
        %733 = vmatpush1.msra.mxu0 0.0
        %734 = vmatprep.subr.mxu0 0.0
        %735 = vmatpush1.msra.mxu0 0.0
        %736 = vmatprep.subr.mxu0 0.0
        %737 = vmatpush1.msra.mxu0 0.0
        %738 = vmatprep.subr.mxu0 0.0
        %739 = vmatpush1.msra.mxu0 0.0
        %740 = vmatprep.subr.mxu0 0.0
        %741 = vmatpush1.msra.mxu0 0.0
        %742 = vmatprep.subr.mxu0 0.0
        %743 = vmatpush1.msra.mxu0 0.0
        %744 = vmatprep.subr.mxu0 0.0
        %745 = vmatpush1.msra.mxu0 0.0
        %746 = vmatprep.subr.mxu0 0.0
        %747 = vmatpush1.msra.mxu0 0.0
        %748 = vmatprep.subr.mxu0 0.0
        %749 = vmatpush1.msra.mxu0 0.0
        %750 = vmatprep.subr.mxu0 0.0
        %751 = vmatpush1.msra.mxu0 0.0
        %752 = vmatprep.subr.mxu0 0.0
        %753 = vmatpush1.msra.mxu0 0.0
        %754 = vmatprep.subr.mxu0 0.0
        %755 = vmatpush1.msra.mxu0 0.0
        %756 = vmatprep.subr.mxu0 0.0
        %757 = vmatpush1.msra.mxu0 0.0
        %758 = vmatprep.mubr.f32.mxu0 0.0
        %759 = vmatmul.mubr.f32.gmra.mrb[0].mxu0 %v692
        %v760 = vpop.f32.mrb[0].mxu0
        %v761 = vadd.f32 0.0, %v760
        %v762 = vpop.f32.mrb[0].mxu0
        %763 = vdwg.mxu0
        %v764 = vrcp.pop %v690
        %v765 = vmul.f32 %v761, %v764
        %767 = vrot.lane.b32.xlu0 %v765, 16
        %v768 = vpop.permute.xlu0 %767
        %vm770 = vcmask 195712
        %771 = vst.msk [vmem:[#allocation2] sm:$0xff] %vm770, %v768
        %s772 = scalar_lea.vmem %s252, 24
        %v773 = vld [vmem:[%s772] sm:$0xff]
        %s774 = scalar_lea.vmem %s257, 24
        %v775 = vld [vmem:[%s774] sm:$0xff]
        %s776 = scalar_lea.vmem %s262, 24
        %v777 = vld [vmem:[%s776] sm:$0xff]
        %v779 = vsel %vm266, %v773, 0
        %v782 = vsel %vm266, %v775, 0
        %784 = vmatprep.subr.mxu0 0.0
        %785 = vmatpush1.xpose.msra.mxu0 %v782
        %786 = vmatprep.subr.mxu0 0.0
        %787 = vmatpush1.xpose.msra.mxu0 0.0
        %788 = vmatprep.subr.mxu0 0.0
        %789 = vmatpush1.xpose.msra.mxu0 0.0
        %790 = vmatprep.subr.mxu0 0.0
        %791 = vmatpush1.xpose.msra.mxu0 0.0
        %792 = vmatprep.subr.mxu0 0.0
        %793 = vmatpush1.xpose.msra.mxu0 0.0
        %794 = vmatprep.subr.mxu0 0.0
        %795 = vmatpush1.xpose.msra.mxu0 0.0
        %796 = vmatprep.subr.mxu0 0.0
        %797 = vmatpush1.xpose.msra.mxu0 0.0
        %798 = vmatprep.subr.mxu0 0.0
        %799 = vmatpush1.xpose.msra.mxu0 0.0
        %800 = vmatprep.subr.mxu0 0.0
        %801 = vmatpush1.xpose.msra.mxu0 0.0
        %802 = vmatprep.subr.mxu0 0.0
        %803 = vmatpush1.xpose.msra.mxu0 0.0
        %804 = vmatprep.subr.mxu0 0.0
        %805 = vmatpush1.xpose.msra.mxu0 0.0
        %806 = vmatprep.subr.mxu0 0.0
        %807 = vmatpush1.xpose.msra.mxu0 0.0
        %808 = vmatprep.subr.mxu0 0.0
        %809 = vmatpush1.xpose.msra.mxu0 0.0
        %810 = vmatprep.subr.mxu0 0.0
        %811 = vmatpush1.xpose.msra.mxu0 0.0
        %812 = vmatprep.subr.mxu0 0.0
        %813 = vmatpush1.xpose.msra.mxu0 0.0
        %814 = vmatprep.subr.mxu0 0.0
        %815 = vmatpush1.xpose.msra.mxu0 0.0
        %816 = vmatprep.subr.mxu0 0.0
        %817 = vmatpush1.xpose.msra.mxu0 0.0
        %818 = vmatprep.subr.mxu0 0.0
        %819 = vmatpush1.xpose.msra.mxu0 0.0
        %820 = vmatprep.subr.mxu0 0.0
        %821 = vmatpush1.xpose.msra.mxu0 0.0
        %822 = vmatprep.subr.mxu0 0.0
        %823 = vmatpush1.xpose.msra.mxu0 0.0
        %824 = vmatprep.subr.mxu0 0.0
        %825 = vmatpush1.xpose.msra.mxu0 0.0
        %826 = vmatprep.subr.mxu0 0.0
        %827 = vmatpush1.xpose.msra.mxu0 0.0
        %828 = vmatprep.subr.mxu0 0.0
        %829 = vmatpush1.xpose.msra.mxu0 0.0
        %830 = vmatprep.subr.mxu0 0.0
        %831 = vmatpush1.xpose.msra.mxu0 0.0
        %832 = vmatprep.subr.mxu0 0.0
        %833 = vmatpush1.xpose.msra.mxu0 0.0
        %834 = vmatprep.subr.mxu0 0.0
        %835 = vmatpush1.xpose.msra.mxu0 0.0
        %836 = vmatprep.subr.mxu0 0.0
        %837 = vmatpush1.xpose.msra.mxu0 0.0
        %838 = vmatprep.subr.mxu0 0.0
        %839 = vmatpush1.xpose.msra.mxu0 0.0
        %840 = vmatprep.subr.mxu0 0.0
        %841 = vmatpush1.xpose.msra.mxu0 0.0
        %842 = vmatprep.subr.mxu0 0.0
        %843 = vmatpush1.xpose.msra.mxu0 0.0
        %844 = vmatprep.subr.mxu0 0.0
        %845 = vmatpush1.xpose.msra.mxu0 0.0
        %846 = vmatprep.subr.mxu0 0.0
        %847 = vmatpush1.xpose.msra.mxu0 0.0
        %848 = vmatprep.mubr.f32.mxu0 0.0
        %849 = vmatmul.mubr.f32.gmra.mrb[0].mxu0 %v779
        %v850 = vpop.f32.mrb[0].mxu0
        %v851 = vadd.f32 0.0, %v850
        %v852 = vpop.f32.mrb[0].mxu0
        %853 = vdwg.mxu0
        %v854 = vsel %vm266, %v851, -inf
        %855 = vmax.xlane.f32.xlu0 %v854
        %v856 = vpop.xlane.xlu0 %855
        %v857 = vsub.f32 %v851, %v856
        %v858 = vmul.f32 %v857, 1.442695
        %v859 = vpow.pop %v858
        %v860 = vsel %vm266, %v859, 0.0
        %861 = vadd.xlane.f32.xlu0 %v860
        %v862 = vpop.xlane.xlu0 %861
        %v864 = vsel %vm266, %v859, 0
        %866 = vmatprep.subr.mxu0 0.0
        %867 = vmatpush1.msra.mxu0 %v777
        %868 = vmatprep.subr.mxu0 0.0
        %869 = vmatpush1.msra.mxu0 0.0
        %870 = vmatprep.subr.mxu0 0.0
        %871 = vmatpush1.msra.mxu0 0.0
        %872 = vmatprep.subr.mxu0 0.0
        %873 = vmatpush1.msra.mxu0 0.0
        %874 = vmatprep.subr.mxu0 0.0
        %875 = vmatpush1.msra.mxu0 0.0
        %876 = vmatprep.subr.mxu0 0.0
        %877 = vmatpush1.msra.mxu0 0.0
        %878 = vmatprep.subr.mxu0 0.0
        %879 = vmatpush1.msra.mxu0 0.0
        %880 = vmatprep.subr.mxu0 0.0
        %881 = vmatpush1.msra.mxu0 0.0
        %882 = vmatprep.subr.mxu0 0.0
        %883 = vmatpush1.msra.mxu0 0.0
        %884 = vmatprep.subr.mxu0 0.0
        %885 = vmatpush1.msra.mxu0 0.0
        %886 = vmatprep.subr.mxu0 0.0
        %887 = vmatpush1.msra.mxu0 0.0
        %888 = vmatprep.subr.mxu0 0.0
        %889 = vmatpush1.msra.mxu0 0.0
        %890 = vmatprep.subr.mxu0 0.0
        %891 = vmatpush1.msra.mxu0 0.0
        %892 = vmatprep.subr.mxu0 0.0
        %893 = vmatpush1.msra.mxu0 0.0
        %894 = vmatprep.subr.mxu0 0.0
        %895 = vmatpush1.msra.mxu0 0.0
        %896 = vmatprep.subr.mxu0 0.0
        %897 = vmatpush1.msra.mxu0 0.0
        %898 = vmatprep.subr.mxu0 0.0
        %899 = vmatpush1.msra.mxu0 0.0
        %900 = vmatprep.subr.mxu0 0.0
        %901 = vmatpush1.msra.mxu0 0.0
        %902 = vmatprep.subr.mxu0 0.0
        %903 = vmatpush1.msra.mxu0 0.0
        %904 = vmatprep.subr.mxu0 0.0
        %905 = vmatpush1.msra.mxu0 0.0
        %906 = vmatprep.subr.mxu0 0.0
        %907 = vmatpush1.msra.mxu0 0.0
        %908 = vmatprep.subr.mxu0 0.0
        %909 = vmatpush1.msra.mxu0 0.0
        %910 = vmatprep.subr.mxu0 0.0
        %911 = vmatpush1.msra.mxu0 0.0
        %912 = vmatprep.subr.mxu0 0.0
        %913 = vmatpush1.msra.mxu0 0.0
        %914 = vmatprep.subr.mxu0 0.0
        %915 = vmatpush1.msra.mxu0 0.0
        %916 = vmatprep.subr.mxu0 0.0
        %917 = vmatpush1.msra.mxu0 0.0
        %918 = vmatprep.subr.mxu0 0.0
        %919 = vmatpush1.msra.mxu0 0.0
        %920 = vmatprep.subr.mxu0 0.0
        %921 = vmatpush1.msra.mxu0 0.0
        %922 = vmatprep.subr.mxu0 0.0
        %923 = vmatpush1.msra.mxu0 0.0
        %924 = vmatprep.subr.mxu0 0.0
        %925 = vmatpush1.msra.mxu0 0.0
        %926 = vmatprep.subr.mxu0 0.0
        %927 = vmatpush1.msra.mxu0 0.0
        %928 = vmatprep.subr.mxu0 0.0
        %929 = vmatpush1.msra.mxu0 0.0
        %930 = vmatprep.mubr.f32.mxu0 0.0
        %931 = vmatmul.mubr.f32.gmra.mrb[0].mxu0 %v864
        %v932 = vpop.f32.mrb[0].mxu0
        %v933 = vadd.f32 0.0, %v932
        %v934 = vpop.f32.mrb[0].mxu0
        %935 = vdwg.mxu0
        %v936 = vrcp.pop %v862
        %v937 = vmul.f32 %v933, %v936
        %939 = vrot.lane.b32.xlu0 %v937, 24
        %v940 = vpop.permute.xlu0 %939
        %vm942 = vcmask 261312
        %943 = vst.msk [vmem:[#allocation2] sm:$0xff] %vm942, %v940
        %v944 = vld [vmem:[#allocation2] sm:$0xff]
        %v945 = vld [vmem:[%s3] sm:$0xff]
        %v946 = vld [vmem:[%s3 + $0x8] sm:$0xff]
        %v947 = vld [vmem:[%s3 + $0x10] sm:$0xff]
        %v948 = vld [vmem:[%s3 + $0x18] sm:$0xff]
        %v949 = vld [vmem:[%s4] sm:$0x1]
        %v951 = vlaneseq
        %v952 = vshrl.u32 %v951, 7
        %v953 = vsub.s32 0, %v952
        %v954 = vrot.slane %v949, %v953
        %vm956 = vcmask 261120
        %v958 = vsel %vm956, %v944, 0
        %960 = vmatprep.subr.mxu0 0.0
        %961 = vmatpush1.msra.mxu0 %v945
        %962 = vmatprep.subr.mxu0 0.0
        %963 = vmatpush1.msra.mxu0 %v946
        %964 = vmatprep.subr.mxu0 0.0
        %965 = vmatpush1.msra.mxu0 %v947
        %966 = vmatprep.subr.mxu0 0.0
        %967 = vmatpush1.msra.mxu0 %v948
        %968 = vmatprep.subr.mxu0 0.0
        %969 = vmatpush1.msra.mxu0 0.0
        %970 = vmatprep.subr.mxu0 0.0
        %971 = vmatpush1.msra.mxu0 0.0
        %972 = vmatprep.subr.mxu0 0.0
        %973 = vmatpush1.msra.mxu0 0.0
        %974 = vmatprep.subr.mxu0 0.0
        %975 = vmatpush1.msra.mxu0 0.0
        %976 = vmatprep.subr.mxu0 0.0
        %977 = vmatpush1.msra.mxu0 0.0
        %978 = vmatprep.subr.mxu0 0.0
        %979 = vmatpush1.msra.mxu0 0.0
        %980 = vmatprep.subr.mxu0 0.0
        %981 = vmatpush1.msra.mxu0 0.0
        %982 = vmatprep.subr.mxu0 0.0
        %983 = vmatpush1.msra.mxu0 0.0
        %984 = vmatprep.subr.mxu0 0.0
        %985 = vmatpush1.msra.mxu0 0.0
        %986 = vmatprep.subr.mxu0 0.0
        %987 = vmatpush1.msra.mxu0 0.0
        %988 = vmatprep.subr.mxu0 0.0
        %989 = vmatpush1.msra.mxu0 0.0
        %990 = vmatprep.subr.mxu0 0.0
        %991 = vmatpush1.msra.mxu0 0.0
        %992 = vmatprep.subr.mxu0 0.0
        %993 = vmatpush1.msra.mxu0 0.0
        %994 = vmatprep.subr.mxu0 0.0
        %995 = vmatpush1.msra.mxu0 0.0
        %996 = vmatprep.subr.mxu0 0.0
        %997 = vmatpush1.msra.mxu0 0.0
        %998 = vmatprep.subr.mxu0 0.0
        %999 = vmatpush1.msra.mxu0 0.0
        %1000 = vmatprep.subr.mxu0 0.0
        %1001 = vmatpush1.msra.mxu0 0.0
        %1002 = vmatprep.subr.mxu0 0.0
        %1003 = vmatpush1.msra.mxu0 0.0
        %1004 = vmatprep.subr.mxu0 0.0
        %1005 = vmatpush1.msra.mxu0 0.0
        %1006 = vmatprep.subr.mxu0 0.0
        %1007 = vmatpush1.msra.mxu0 0.0
        %1008 = vmatprep.subr.mxu0 0.0
        %1009 = vmatpush1.msra.mxu0 0.0
        %1010 = vmatprep.subr.mxu0 0.0
        %1011 = vmatpush1.msra.mxu0 0.0
        %1012 = vmatprep.subr.mxu0 0.0
        %1013 = vmatpush1.msra.mxu0 0.0
        %1014 = vmatprep.subr.mxu0 0.0
        %1015 = vmatpush1.msra.mxu0 0.0
        %1016 = vmatprep.subr.mxu0 0.0
        %1017 = vmatpush1.msra.mxu0 0.0
        %1018 = vmatprep.subr.mxu0 0.0
        %1019 = vmatpush1.msra.mxu0 0.0
        %1020 = vmatprep.subr.mxu0 0.0
        %1021 = vmatpush1.msra.mxu0 0.0
        %1022 = vmatprep.subr.mxu0 0.0
        %1023 = vmatpush1.msra.mxu0 0.0
        %1024 = vmatprep.mubr.f32.mxu0 0.0
        %1025 = vmatmul.mubr.f32.gmra.mrb[0].mxu0 %v958
        %v1026 = vpop.f32.mrb[0].mxu0
        %v1027 = vadd.f32 %v954, %v1026
        %v1028 = vpop.f32.mrb[0].mxu0
        %1029 = vdwg.mxu0
        %1030 = vst.msk [vmem:[%s247] sm:$0xff] %vm956, %v1027
        %s1031 = sand.u32 %s147, 1
        %s1032 = scalar_lea.sflag [#allocation4], %s1031
        %s1033 = sand.u32 %s147, 1
        %s1034 = smul.addr %s1033, 8
        %s1035 = scalar_lea.vmem [#allocation3], %s1034
        // Predicated region
        $region41: #{self_attention.3} parent=39 // pred_check
          %p1036 = pneg %p157
        $region42: #{self_attention.3} parent=39 // pred_check_branch
          %1038 = sbr.rel (%p1036) target = $region44
        $region43: #{self_attention.3} parent=39 // pred_region
          %s1040 = ssub.s32 128, 128
          %1041 = vsyncadd %s1032, %s1040
          %s1042 = smul.addr %s19, 128
          %s1043 = scalar_lea.hbm %s5, %s1042
          %s1045 = sshll.u32 %s1035, 4
          %s1046 = int_to_ptr.vmem [resolvable:$true] %s1045
          %1048 = dma.vmem_to_hbm [thread:$0]  %s1046, 128, %s1043, %s1032
        $region44: #{self_attention.3} parent=39 // pred_fallthru
          _
      $region40: #{self_attention.3} parent=5 // pred_fallthru
        _
      %p1049 = scmp.le.s32.totalorder 2, %s14
      // Predicated region
      $region45: #{self_attention.3} parent=5 // pred_check
        %p1050 = pneg %p1049
      $region46: #{self_attention.3} parent=5 // pred_check_branch
        %1052 = sbr.rel (%p1050) target = $region48
      $region47: #{self_attention.3} parent=5 // pred_region
        %s1053 = ssub.s32 %s14, 2
        // Predicated region
        $region49: #{self_attention.3} parent=47 // pred_check
          %p1054 = pneg %p163
        $region50: #{self_attention.3} parent=47 // pred_check_branch
          %1056 = sbr.rel (%p1054) target = $region52
        $region51: #{self_attention.3} parent=47 // pred_region
          %s1057 = sand.u32 %s148, 1
          %s1058 = scalar_lea.sflag [#allocation4], %s1057
          %s1059 = sand.u32 %s148, 1
          %s1060 = smul.addr %s1059, 8
          %s1061 = scalar_lea.vmem [#allocation3], %s1060
          %1062 = dma.done %s1058, 128
        $region52: #{self_attention.3} parent=47 // pred_fallthru
          _
      $region48: #{self_attention.3} parent=5 // pred_fallthru
        _
    $region6: #{self_attention.3} parent=1 // loop_footer
      %s18 = sadd.s32 1, %s14
    $region7: #{self_attention.3} parent=1 // loop_footer_branch
      %13 = sbr.rel target = $region3
    $region8: #{self_attention.3} parent=1 // loop_exit
      _
    %1063 = vsyncpa [#allocation4], 1
    %s1064 = scalar_lea.sflag [#allocation4], 1
    %1065 = vsyncpa %s1064, 1

</llo_original>
